<compile_context>
chip_gen: v6e
topology: v6e:2x2x1
jax: 0.10.0
libtpu: 0.0.40
codegen_flags: <defaults>
</compile_context>

<pallas_src>
import jax
import jax.numpy as jnp
from jax.experimental import pallas as pl
from jax.experimental.pallas import tpu as pltpu

BN_EPS = 1e-5


def _make_dense_layer_kernel(H, W, Cin, Cmid, Cg, TOTP):
    """Fused DenseLayer kernel for static spatial/channel sizes (channel-major)."""
    HW = H * W

    def kernel(x_ref, w1t_ref, s1_ref, b1_ref, w2s_ref, b2_ref, o_ref, a_scr):
        # ---- stage 1: BN1 -> ReLU -> 1x1 conv (BN2 scale pre-folded) -> +b2 -> ReLU
        x = x_ref[0]                                            # (Cin, HW) f32
        h = jnp.maximum(x * s1_ref[...] + b1_ref[...], 0.0)     # (Cin, HW)
        bott = jnp.dot(w1t_ref[...], h.astype(jnp.bfloat16),
                       preferred_element_type=jnp.float32)      # (Cmid, HW)
        a = jnp.maximum(bott + b2_ref[...], 0.0)                # (Cmid, HW)

        # Stage the activated bottleneck ONCE, in bf16, with zero pad lanes.
        a_scr[:, 0:HW] = a.astype(jnp.bfloat16)
        a_scr[:, HW:TOTP] = jnp.zeros((Cmid, TOTP - HW), jnp.bfloat16)

        # ---- stage 2: 3x3 conv (pad=1) as ONE stacked matmul + 9 rolled reads
        p_taps = jnp.dot(w2s_ref[...], a_scr[...],
                         preferred_element_type=jnp.float32)    # (9*Cg, TOTP)

        xpos = jax.lax.broadcasted_iota(jnp.int32, (1, HW), 1) % W
        mask_l = xpos >= 1          # tap reads x-1: invalid at x == 0
        mask_r = xpos <= W - 2      # tap reads x+1: invalid at x == W-1

        acc = jnp.zeros((Cg, HW), jnp.float32)
        for ki in range(3):
            for kj in range(3):
                t = ki * 3 + kj
                off = (ki - 1) * W + (kj - 1)       # flat spatial offset of tap
                blk = p_taps[t * Cg:(t + 1) * Cg, :]   # sublane-aligned row block
                if off != 0:
                    blk = pltpu.roll(blk, shift=(-off) % TOTP, axis=1)
                term = blk[:, 0:HW]                    # lane-aligned slice
                if kj == 0:
                    term = jnp.where(mask_l, term, 0.0)
                elif kj == 2:
                    term = jnp.where(mask_r, term, 0.0)
                acc = acc + term

        o_ref[0] = acc.astype(o_ref.dtype)             # (Cg, HW): lane-dense

    return kernel


def dense_layer_forward(inputs, params, drop_rate=0.0):
    """Inference forward of DenseLayer.

    inputs: one NCHW array or a list/tuple of NCHW arrays (concatenated along
    channels, matching DenseLayer.bn_function).  Returns (N, growth_rate, H, W).
    drop_rate is accepted for signature parity; dropout is identity at inference.
    """
    if isinstance(inputs, (list, tuple)):
        x = jnp.concatenate(list(inputs), axis=1)
    else:
        x = inputs
    N, Cin, H, W = x.shape

    (g1, be1, m1, v1, w1, g2, be2, m2, v2, w2) = params
    Cmid = w1.shape[1]          # bn_size * growth_rate
    Cg = w2.shape[3]            # growth_rate
    HW = H * W
    # Pad lanes up to a multiple of 128 that covers one image row of bleed on
    # both sides (top-row reads arrive via roll wrap-around into the pad).
    TOTP = ((HW + 2 * W + 127) // 128) * 128

    # Fold BatchNorm (inference running stats) into per-channel scale/shift.
    inv1 = g1 / jnp.sqrt(v1 + BN_EPS)
    inv2 = g2 / jnp.sqrt(v2 + BN_EPS)
    s1 = inv1.reshape(Cin, 1)
    b1 = (be1 - m1 * inv1).reshape(Cin, 1)
    b2 = (be2 - m2 * inv2).reshape(Cmid, 1)

    # Fold the BN2 scale into the 1x1 weights (one-time prescale, outside the
    # kernel); transpose to (Cmid, Cin) for the channel-major matmul.
    # (From PyTorch: w1 = conv1.weight.reshape(Cmid, Cin).T,
    #                w2 = conv2.weight.permute(2, 3, 1, 0)  i.e. HWIO.)
    w1t = (w1 * inv2[None, :]).T.astype(jnp.bfloat16)            # (Cmid, Cin)
    # Stack the nine 3x3 taps along the M dim: row block t = ki*3 + kj.
    w2s = jnp.transpose(w2, (0, 1, 3, 2)).reshape(9 * Cg, Cmid).astype(jnp.bfloat16)

    x_flat = x.reshape(N, Cin, HW)      # pure reshape; NCHW stays channel-major

    kernel = _make_dense_layer_kernel(H, W, Cin, Cmid, Cg, TOTP)

    out = pl.pallas_call(
        kernel,
        out_shape=jax.ShapeDtypeStruct((N, Cg, HW), jnp.float32),
        grid_spec=pltpu.PrefetchScalarGridSpec(
            num_scalar_prefetch=0,
            grid=(N,),
            in_specs=[
                pl.BlockSpec((1, Cin, HW), lambda n: (n, 0, 0)),
                pl.BlockSpec((Cmid, Cin), lambda n: (0, 0)),
                pl.BlockSpec((Cin, 1), lambda n: (0, 0)),
                pl.BlockSpec((Cin, 1), lambda n: (0, 0)),
                pl.BlockSpec((9 * Cg, Cmid), lambda n: (0, 0)),
                pl.BlockSpec((Cmid, 1), lambda n: (0, 0)),
            ],
            out_specs=pl.BlockSpec((1, Cg, HW), lambda n: (n, 0, 0)),
            scratch_shapes=[pltpu.VMEM((Cmid, TOTP), jnp.bfloat16)],
        ),
        compiler_params=pltpu.CompilerParams(
            dimension_semantics=("parallel",)),
    )(x_flat, w1t, s1, b1, w2s, b2)

    # (N, Cg, HW) is already channel-major -> NCHW by reshape only.
    return out.reshape(N, Cg, H, W)


def dense_layer_reference(inputs, params):
    """Pure-JAX/XLA reference (f32) with identical inference semantics."""
    if isinstance(inputs, (list, tuple)):
        x = jnp.concatenate(list(inputs), axis=1)
    else:
        x = inputs
    (g1, be1, m1, v1, w1, g2, be2, m2, v2, w2) = params

    def bn(t, g, b, m, v):
        sh = (1, t.shape[1], 1, 1)
        return (t - m.reshape(sh)) * (g.reshape(sh) / jnp.sqrt(v.reshape(sh) + BN_EPS)) + b.reshape(sh)

    h = jnp.maximum(bn(x, g1, be1, m1, v1), 0.0)
    bott = jnp.einsum("nchw,cd->ndhw", h, w1)
    a = jnp.maximum(bn(bott, g2, be2, m2, v2), 0.0)
    out = jax.lax.conv_general_dilated(
        a, w2, window_strides=(1, 1), padding=((1, 1), (1, 1)),
        dimension_numbers=("NCHW", "HWIO", "NCHW"))
    return out


def init_dense_layer_params(key, num_input_features, growth_rate, bn_size):
    Cin = num_input_features
    Cmid = bn_size * growth_rate
    Cg = growth_rate
    k = jax.random.split(key, 10)
    g1 = 1.0 + 0.1 * jax.random.normal(k[0], (Cin,), jnp.float32)
    be1 = 0.1 * jax.random.normal(k[1], (Cin,), jnp.float32)
    m1 = 0.1 * jax.random.normal(k[2], (Cin,), jnp.float32)
    v1 = 1.0 + 0.05 * jax.random.uniform(k[3], (Cin,), jnp.float32)
    w1 = jax.random.normal(k[4], (Cin, Cmid), jnp.float32) / jnp.sqrt(float(Cin))
    g2 = 1.0 + 0.1 * jax.random.normal(k[5], (Cmid,), jnp.float32)
    be2 = 0.1 * jax.random.normal(k[6], (Cmid,), jnp.float32)
    m2 = 0.1 * jax.random.normal(k[7], (Cmid,), jnp.float32)
    v2 = 1.0 + 0.05 * jax.random.uniform(k[8], (Cmid,), jnp.float32)
    w2 = jax.random.normal(k[9], (3, 3, Cmid, Cg), jnp.float32) / jnp.sqrt(9.0 * Cmid)
    return (g1, be1, m1, v1, w1, g2, be2, m2, v2, w2)


if __name__ == "__main__":
    key = jax.random.PRNGKey(0)
    kx1, kx2, kp = jax.random.split(key, 3)

    # Module-consistent small shapes: DenseNet defaults growth_rate=32,
    # bn_size=4; two previous feature maps of 64 channels each, 16x16, batch 2.
    N, H, W = 2, 16, 16
    growth_rate, bn_size = 32, 4
    prev0 = jax.random.normal(kx1, (N, 64, H, W), jnp.float32)
    prev1 = jax.random.normal(kx2, (N, 64, H, W), jnp.float32)
    num_input_features = prev0.shape[1] + prev1.shape[1]   # 128

    params = init_dense_layer_params(kp, num_input_features, growth_rate, bn_size)

    fwd = jax.jit(lambda a, b: dense_layer_forward([a, b], params))
    out = fwd(prev0, prev1)
    jax.block_until_ready(out)

    assert out.shape == (N, growth_rate, H, W), out.shape
    assert bool(jnp.all(jnp.isfinite(out)))

    # Correctness vs a pure-XLA f32 reference (kernel uses bf16 MXU inputs;
    # inference-only precision tradeoff).
    ref = dense_layer_reference([prev0, prev1], params)
    assert bool(jnp.allclose(out, ref, rtol=5e-2, atol=5e-2)), \
        float(jnp.max(jnp.abs(out - ref)))

    print("KERNEL_OK")
</pallas_src>

<mosaic_0001>
module attributes {stable_mosaic.version = 11 : i64} {
  func.func @kernel(%arg0: i32, %arg1: memref<1x128x256xf32, #tpu.memory_space<vmem>>, %arg2: memref<128x128xbf16, #tpu.memory_space<vmem>>, %arg3: memref<128x1xf32, #tpu.memory_space<vmem>>, %arg4: memref<128x1xf32, #tpu.memory_space<vmem>>, %arg5: memref<288x128xbf16, #tpu.memory_space<vmem>>, %arg6: memref<128x1xf32, #tpu.memory_space<vmem>>, %arg7: memref<1x32x256xf32, #tpu.memory_space<vmem>>, %arg8: memref<128x384xbf16, #tpu.memory_space<vmem>>) attributes {dimension_semantics = [#tpu.dimension_semantics<parallel>], iteration_bounds = array<i64: 2>, scalar_prefetch = 0 : i64, scratch_operands = 1 : i64, tpu.core_type = #tpu.core_type<tc>, window_params = [{transform_indices = @transform_0, window_bounds = array<i64: 1, 128, 256>}, {pipeline_mode = #tpu.pipeline_mode<synchronous>, transform_indices = @transform_1, window_bounds = array<i64: 128, 128>}, {pipeline_mode = #tpu.pipeline_mode<synchronous>, transform_indices = @transform_2, window_bounds = array<i64: 128, 1>}, {pipeline_mode = #tpu.pipeline_mode<synchronous>, transform_indices = @transform_3, window_bounds = array<i64: 128, 1>}, {pipeline_mode = #tpu.pipeline_mode<synchronous>, transform_indices = @transform_4, window_bounds = array<i64: 288, 128>}, {pipeline_mode = #tpu.pipeline_mode<synchronous>, transform_indices = @transform_5, window_bounds = array<i64: 128, 1>}, {transform_indices = @transform_6, window_bounds = array<i64: 1, 32, 256>}]} {
    %c0 = arith.constant 0 : index
    %c0_0 = arith.constant 0 : index
    %c0_1 = arith.constant 0 : index
    %0 = vector.load %arg1[%c0, %c0_0, %c0_1] : memref<1x128x256xf32, #tpu.memory_space<vmem>>, vector<1x128x256xf32>
    %1 = vector.shape_cast %0 : vector<1x128x256xf32> to vector<128x256xf32>
    %c0_2 = arith.constant 0 : index
    %c0_3 = arith.constant 0 : index
    %2 = vector.load %arg3[%c0_2, %c0_3] : memref<128x1xf32, #tpu.memory_space<vmem>>, vector<128x1xf32>
    %3 = vector.broadcast %2 : vector<128x1xf32> to vector<128x256xf32>
    %4 = arith.mulf %1, %3 : vector<128x256xf32>
    %c0_4 = arith.constant 0 : index
    %c0_5 = arith.constant 0 : index
    %5 = vector.load %arg4[%c0_4, %c0_5] : memref<128x1xf32, #tpu.memory_space<vmem>>, vector<128x1xf32>
    %6 = vector.broadcast %5 : vector<128x1xf32> to vector<128x256xf32>
    %7 = arith.addf %4, %6 : vector<128x256xf32>
    %cst = arith.constant 0.000000e+00 : f32
    %8 = vector.broadcast %cst : f32 to vector<128x256xf32>
    %9 = arith.maximumf %7, %8 : vector<128x256xf32>
    %c0_6 = arith.constant 0 : index
    %c0_7 = arith.constant 0 : index
    %10 = vector.load %arg2[%c0_6, %c0_7] : memref<128x128xbf16, #tpu.memory_space<vmem>>, vector<128x128xbf16>
    %11 = arith.truncf %9 : vector<128x256xf32> to vector<128x256xbf16>
    %cst_8 = arith.constant dense<0.000000e+00> : vector<128x256xf32>
    %12 = tpu.matmul %10, %11, %cst_8 {dimension_numbers = #tpu.dot_dimension_numbers<[1], [0], [0], [1], [0, 0, 1, 1], [], []>} : vector<128x128xbf16>, vector<128x256xbf16>, vector<128x256xf32> -> vector<128x256xf32>
    %c0_9 = arith.constant 0 : index
    %c0_10 = arith.constant 0 : index
    %13 = vector.load %arg6[%c0_9, %c0_10] : memref<128x1xf32, #tpu.memory_space<vmem>>, vector<128x1xf32>
    %14 = vector.broadcast %13 : vector<128x1xf32> to vector<128x256xf32>
    %15 = arith.addf %12, %14 : vector<128x256xf32>
    %cst_11 = arith.constant 0.000000e+00 : f32
    %16 = vector.broadcast %cst_11 : f32 to vector<128x256xf32>
    %17 = arith.maximumf %15, %16 : vector<128x256xf32>
    %18 = arith.truncf %17 : vector<128x256xf32> to vector<128x256xbf16>
    %c0_12 = arith.constant 0 : index
    %c0_13 = arith.constant 0 : index
    %19 = vector.load %arg8[%c0_12, %c0_13] : memref<128x384xbf16, #tpu.memory_space<vmem>>, vector<128x256xbf16>
    tpu.vector_store %arg8[%c0_12, %c0_13], %18 {strides = array<i32>} : memref<128x384xbf16, #tpu.memory_space<vmem>>, vector<128x256xbf16>,
    %cst_14 = arith.constant 0.000000e+00 : bf16
    %20 = vector.broadcast %cst_14 : bf16 to vector<128x128xbf16>
    %c0_15 = arith.constant 0 : index
    %c256 = arith.constant 256 : index
    %21 = vector.load %arg8[%c0_15, %c256] : memref<128x384xbf16, #tpu.memory_space<vmem>>, vector<128x128xbf16>
    tpu.vector_store %arg8[%c0_15, %c256], %20 {strides = array<i32>} : memref<128x384xbf16, #tpu.memory_space<vmem>>, vector<128x128xbf16>,
    %c0_16 = arith.constant 0 : index
    %c0_17 = arith.constant 0 : index
    %22 = vector.load %arg5[%c0_16, %c0_17] : memref<288x128xbf16, #tpu.memory_space<vmem>>, vector<288x128xbf16>
    %c0_18 = arith.constant 0 : index
    %c0_19 = arith.constant 0 : index
    %23 = vector.load %arg8[%c0_18, %c0_19] : memref<128x384xbf16, #tpu.memory_space<vmem>>, vector<128x384xbf16>
    %cst_20 = arith.constant dense<0.000000e+00> : vector<288x384xf32>
    %24 = tpu.matmul %22, %23, %cst_20 {dimension_numbers = #tpu.dot_dimension_numbers<[1], [0], [0], [1], [0, 0, 1, 1], [], []>} : vector<288x128xbf16>, vector<128x384xbf16>, vector<288x384xf32> -> vector<288x384xf32>
    %25 = tpu.iota {dimensions = array<i32: 1>} : vector<1x256xi32>
    %c16_i32 = arith.constant 16 : i32
    %c0_i32 = arith.constant 0 : i32
    %26 = arith.cmpi eq, %c16_i32, %c0_i32 : i32
    %c1_i32 = arith.constant 1 : i32
    %27 = arith.select %26, %c1_i32, %c16_i32 : i32
    %28 = vector.broadcast %27 : i32 to vector<1x256xi32>
    %29 = arith.remsi %25, %28 : vector<1x256xi32>
    %c0_i32_21 = arith.constant 0 : i32
    %30 = vector.broadcast %c0_i32_21 : i32 to vector<1x256xi32>
    %31 = arith.cmpi ne, %29, %30 : vector<1x256xi32>
    %c0_i32_22 = arith.constant 0 : i32
    %32 = vector.broadcast %c0_i32_22 : i32 to vector<1x256xi32>
    %33 = arith.cmpi slt, %29, %32 : vector<1x256xi32>
    %c0_i32_23 = arith.constant 0 : i32
    %34 = arith.cmpi slt, %27, %c0_i32_23 : i32
    %35 = vector.broadcast %34 : i1 to vector<1x256xi1>
    %36 = vector.broadcast %35 : vector<1x256xi1> to vector<1x256xi1>
    %37 = arith.xori %33, %36 : vector<1x256xi1>
    %38 = arith.andi %37, %31 : vector<1x256xi1>
    %39 = vector.broadcast %27 : i32 to vector<1x256xi32>
    %40 = arith.addi %29, %39 : vector<1x256xi32>
    %41 = arith.select %38, %40, %29 : vector<1x256xi1>, vector<1x256xi32>
    %c1_i32_24 = arith.constant 1 : i32
    %42 = vector.broadcast %c1_i32_24 : i32 to vector<1x256xi32>
    %43 = arith.cmpi sge, %41, %42 : vector<1x256xi32>
    %c14_i32 = arith.constant 14 : i32
    %44 = vector.broadcast %c14_i32 : i32 to vector<1x256xi32>
    %45 = arith.cmpi sle, %41, %44 : vector<1x256xi32>
    %cst_25 = arith.constant 0.000000e+00 : f32
    %46 = vector.broadcast %cst_25 : f32 to vector<32x256xf32>
    %47 = vector.extract_strided_slice %24 {offsets = [0, 0], sizes = [32, 384], strides = [1, 1]} : vector<288x384xf32> to vector<32x384xf32>
    %c17_i32 = arith.constant 17 : i32
    %48 = tpu.dynamic_rotate %47 by %c17_i32 dim 1 : vector<32x384xf32>, i32 -> vector<32x384xf32>
    %49 = vector.extract_strided_slice %48 {offsets = [0, 0], sizes = [32, 256], strides = [1, 1]} : vector<32x384xf32> to vector<32x256xf32>
    %cst_26 = arith.constant 0.000000e+00 : f32
    %50 = vector.shape_cast %43 : vector<1x256xi1> to vector<1x256xi1>
    %51 = vector.broadcast %50 : vector<1x256xi1> to vector<32x256xi1>
    %52 = vector.broadcast %cst_26 : f32 to vector<32x256xf32>
    %53 = arith.select %51, %49, %52 : vector<32x256xi1>, vector<32x256xf32>
    %54 = arith.addf %46, %53 : vector<32x256xf32>
    %55 = vector.extract_strided_slice %24 {offsets = [32, 0], sizes = [32, 384], strides = [1, 1]} : vector<288x384xf32> to vector<32x384xf32>
    %c16_i32_27 = arith.constant 16 : i32
    %56 = tpu.dynamic_rotate %55 by %c16_i32_27 dim 1 : vector<32x384xf32>, i32 -> vector<32x384xf32>
    %57 = vector.extract_strided_slice %56 {offsets = [0, 0], sizes = [32, 256], strides = [1, 1]} : vector<32x384xf32> to vector<32x256xf32>
    %58 = arith.addf %54, %57 : vector<32x256xf32>
    %59 = vector.extract_strided_slice %24 {offsets = [64, 0], sizes = [32, 384], strides = [1, 1]} : vector<288x384xf32> to vector<32x384xf32>
    %c15_i32 = arith.constant 15 : i32
    %60 = tpu.dynamic_rotate %59 by %c15_i32 dim 1 : vector<32x384xf32>, i32 -> vector<32x384xf32>
    %61 = vector.extract_strided_slice %60 {offsets = [0, 0], sizes = [32, 256], strides = [1, 1]} : vector<32x384xf32> to vector<32x256xf32>
    %cst_28 = arith.constant 0.000000e+00 : f32
    %62 = vector.shape_cast %45 : vector<1x256xi1> to vector<1x256xi1>
    %63 = vector.broadcast %62 : vector<1x256xi1> to vector<32x256xi1>
    %64 = vector.broadcast %cst_28 : f32 to vector<32x256xf32>
    %65 = arith.select %63, %61, %64 : vector<32x256xi1>, vector<32x256xf32>
    %66 = arith.addf %58, %65 : vector<32x256xf32>
    %67 = vector.extract_strided_slice %24 {offsets = [96, 0], sizes = [32, 384], strides = [1, 1]} : vector<288x384xf32> to vector<32x384xf32>
    %c1_i32_29 = arith.constant 1 : i32
    %68 = tpu.dynamic_rotate %67 by %c1_i32_29 dim 1 : vector<32x384xf32>, i32 -> vector<32x384xf32>
    %69 = vector.extract_strided_slice %68 {offsets = [0, 0], sizes = [32, 256], strides = [1, 1]} : vector<32x384xf32> to vector<32x256xf32>
    %cst_30 = arith.constant 0.000000e+00 : f32
    %70 = vector.shape_cast %43 : vector<1x256xi1> to vector<1x256xi1>
    %71 = vector.broadcast %70 : vector<1x256xi1> to vector<32x256xi1>
    %72 = vector.broadcast %cst_30 : f32 to vector<32x256xf32>
    %73 = arith.select %71, %69, %72 : vector<32x256xi1>, vector<32x256xf32>
    %74 = arith.addf %66, %73 : vector<32x256xf32>
    %75 = vector.extract_strided_slice %24 {offsets = [128, 0], sizes = [32, 384], strides = [1, 1]} : vector<288x384xf32> to vector<32x384xf32>
    %76 = vector.extract_strided_slice %75 {offsets = [0, 0], sizes = [32, 256], strides = [1, 1]} : vector<32x384xf32> to vector<32x256xf32>
    %77 = arith.addf %74, %76 : vector<32x256xf32>
    %78 = vector.extract_strided_slice %24 {offsets = [160, 0], sizes = [32, 384], strides = [1, 1]} : vector<288x384xf32> to vector<32x384xf32>
    %c383_i32 = arith.constant 383 : i32
    %79 = tpu.dynamic_rotate %78 by %c383_i32 dim 1 : vector<32x384xf32>, i32 -> vector<32x384xf32>
    %80 = vector.extract_strided_slice %79 {offsets = [0, 0], sizes = [32, 256], strides = [1, 1]} : vector<32x384xf32> to vector<32x256xf32>
    %cst_31 = arith.constant 0.000000e+00 : f32
    %81 = vector.shape_cast %45 : vector<1x256xi1> to vector<1x256xi1>
    %82 = vector.broadcast %81 : vector<1x256xi1> to vector<32x256xi1>
    %83 = vector.broadcast %cst_31 : f32 to vector<32x256xf32>
    %84 = arith.select %82, %80, %83 : vector<32x256xi1>, vector<32x256xf32>
    %85 = arith.addf %77, %84 : vector<32x256xf32>
    %86 = vector.extract_strided_slice %24 {offsets = [192, 0], sizes = [32, 384], strides = [1, 1]} : vector<288x384xf32> to vector<32x384xf32>
    %c369_i32 = arith.constant 369 : i32
    %87 = tpu.dynamic_rotate %86 by %c369_i32 dim 1 : vector<32x384xf32>, i32 -> vector<32x384xf32>
    %88 = vector.extract_strided_slice %87 {offsets = [0, 0], sizes = [32, 256], strides = [1, 1]} : vector<32x384xf32> to vector<32x256xf32>
    %cst_32 = arith.constant 0.000000e+00 : f32
    %89 = vector.shape_cast %43 : vector<1x256xi1> to vector<1x256xi1>
    %90 = vector.broadcast %89 : vector<1x256xi1> to vector<32x256xi1>
    %91 = vector.broadcast %cst_32 : f32 to vector<32x256xf32>
    %92 = arith.select %90, %88, %91 : vector<32x256xi1>, vector<32x256xf32>
    %93 = arith.addf %85, %92 : vector<32x256xf32>
    %94 = vector.extract_strided_slice %24 {offsets = [224, 0], sizes = [32, 384], strides = [1, 1]} : vector<288x384xf32> to vector<32x384xf32>
    %c368_i32 = arith.constant 368 : i32
    %95 = tpu.dynamic_rotate %94 by %c368_i32 dim 1 : vector<32x384xf32>, i32 -> vector<32x384xf32>
    %96 = vector.extract_strided_slice %95 {offsets = [0, 0], sizes = [32, 256], strides = [1, 1]} : vector<32x384xf32> to vector<32x256xf32>
    %97 = arith.addf %93, %96 : vector<32x256xf32>
    %98 = vector.extract_strided_slice %24 {offsets = [256, 0], sizes = [32, 384], strides = [1, 1]} : vector<288x384xf32> to vector<32x384xf32>
    %c367_i32 = arith.constant 367 : i32
    %99 = tpu.dynamic_rotate %98 by %c367_i32 dim 1 : vector<32x384xf32>, i32 -> vector<32x384xf32>
    %100 = vector.extract_strided_slice %99 {offsets = [0, 0], sizes = [32, 256], strides = [1, 1]} : vector<32x384xf32> to vector<32x256xf32>
    %cst_33 = arith.constant 0.000000e+00 : f32
    %101 = vector.shape_cast %45 : vector<1x256xi1> to vector<1x256xi1>
    %102 = vector.broadcast %101 : vector<1x256xi1> to vector<32x256xi1>
    %103 = vector.broadcast %cst_33 : f32 to vector<32x256xf32>
    %104 = arith.select %102, %100, %103 : vector<32x256xi1>, vector<32x256xf32>
    %105 = arith.addf %97, %104 : vector<32x256xf32>
    %c0_34 = arith.constant 0 : index
    %c0_35 = arith.constant 0 : index
    %c0_36 = arith.constant 0 : index
    %106 = vector.load %arg7[%c0_34, %c0_35, %c0_36] : memref<1x32x256xf32, #tpu.memory_space<vmem>>, vector<1x32x256xf32>
    %107 = vector.shape_cast %106 : vector<1x32x256xf32> to vector<32x256xf32>
    %108 = vector.shape_cast %105 : vector<32x256xf32> to vector<1x32x256xf32>
    tpu.vector_store %arg7[%c0_34, %c0_35, %c0_36], %108 {strides = array<i32>} : memref<1x32x256xf32, #tpu.memory_space<vmem>>, vector<1x32x256xf32>,
    return
  }
  func.func @transform_0(%arg0: i32) -> (i32, i32, i32) {
    %c0_i32 = arith.constant 0 : i32
    %c0_i32_0 = arith.constant 0 : i32
    %c0_i32_1 = arith.constant 0 : i32
    return %arg0, %c0_i32, %c0_i32_0 : i32, i32, i32
  }
  func.func @transform_1(%arg0: i32) -> (i32, i32) {
    %c0_i32 = arith.constant 0 : i32
    %c0_i32_0 = arith.constant 0 : i32
    %c0_i32_1 = arith.constant 0 : i32
    return %c0_i32, %c0_i32_0 : i32, i32
  }
  func.func @transform_2(%arg0: i32) -> (i32, i32) {
    %c0_i32 = arith.constant 0 : i32
    %c0_i32_0 = arith.constant 0 : i32
    %c0_i32_1 = arith.constant 0 : i32
    return %c0_i32, %c0_i32_0 : i32, i32
  }
  func.func @transform_3(%arg0: i32) -> (i32, i32) {
    %c0_i32 = arith.constant 0 : i32
    %c0_i32_0 = arith.constant 0 : i32
    %c0_i32_1 = arith.constant 0 : i32
    return %c0_i32, %c0_i32_0 : i32, i32
  }
  func.func @transform_4(%arg0: i32) -> (i32, i32) {
    %c0_i32 = arith.constant 0 : i32
    %c0_i32_0 = arith.constant 0 : i32
    %c0_i32_1 = arith.constant 0 : i32
    return %c0_i32, %c0_i32_0 : i32, i32
  }
  func.func @transform_5(%arg0: i32) -> (i32, i32) {
    %c0_i32 = arith.constant 0 : i32
    %c0_i32_0 = arith.constant 0 : i32
    %c0_i32_1 = arith.constant 0 : i32
    return %c0_i32, %c0_i32_0 : i32, i32
  }
  func.func @transform_6(%arg0: i32) -> (i32, i32, i32) {
    %c0_i32 = arith.constant 0 : i32
    %c0_i32_0 = arith.constant 0 : i32
    %c0_i32_1 = arith.constant 0 : i32
    return %arg0, %c0_i32, %c0_i32_0 : i32, i32, i32
  }
}

</mosaic_0001>

<llo_original>
// kernel: _lambda_.1
$region0: #{_lambda_.1}
  #allocation0 [shape = 'u32[]', space=smem, size = 0x4, offset = 0x4, fixed_abs, tag = 'smem constant byte address 0x4 - core index']
  #allocation1 [shape = 'u32[144,128]{1,0:T(1,128)}', space=vmem, size = 0x12000, scoped, tag = 'internal scratch']
  #allocation2 [shape = 'bf16[128,384]{1,0:T(8,128)(2,1)}', space=vmem, size = 0x18000, scoped, tag = 'scratch operand']
  %s0 = inlined_call_operand.vmem [shape: f32[2,128,256], index: 0, kind: input, shape index: {}]
  %s1 = inlined_call_operand.vmem [shape: bf16[128,128], index: 1, kind: input, shape index: {}]
  %s2 = inlined_call_operand.vmem [shape: f32[128,1], index: 2, kind: input, shape index: {}]
  %s3 = inlined_call_operand.vmem [shape: f32[128,1], index: 3, kind: input, shape index: {}]
  %s4 = inlined_call_operand.vmem [shape: bf16[288,128], index: 4, kind: input, shape index: {}]
  %s5 = inlined_call_operand.vmem [shape: f32[128,1], index: 5, kind: input, shape index: {}]
  %s6 = inlined_call_operand.vmem [shape: f32[2,32,256], index: 6, kind: output, shape index: {}]
  %s7 = sld [smem:[#allocation0]]
  $region57: #{_lambda_.1} parent=0
    _
  %s9 = ssub.s32 1, %s7
  %s10 = scalar_select 0, %s9, %s7
  loop: start=0, step=1, limit=4
  $region2: #{_lambda_.1} parent=0 // loop_pre_header
    _
  $region3: #{_lambda_.1} parent=0 // loop_header
    %s12 = sphi 0, %s16
    %p13 = scmp.ge.s32.totalorder %s12, 4
    %s22 = sphi 0, %s24
    %s25 = sphi 0, %s22
    %s26 = sphi 0, %s25
    %s42 = sphi 0, %s26
    %s46 = sphi 0, %s46
    %s48 = sphi 0, %s46
    %s49 = sphi 0, %s48
    %s63 = sphi 0, %s49
    %s67 = sphi 0, %s67
    %s69 = sphi 0, %s67
    %s70 = sphi 0, %s69
    %s84 = sphi 0, %s70
    %s88 = sphi 0, %s88
    %s90 = sphi 0, %s88
    %s91 = sphi 0, %s90
    %s105 = sphi 0, %s91
    %s109 = sphi 0, %s109
    %s111 = sphi 0, %s109
    %s112 = sphi 0, %s111
    %s126 = sphi 0, %s112
    %s130 = sphi 0, %s130
    %s132 = sphi 0, %s130
    %s133 = sphi 0, %s132
    %s147 = sphi 0, %s133
    %s153 = sphi 0, %s155
    %s156 = sphi 0, %s153
    %s157 = sphi 0, %s156
    %s173 = sphi 0, %s157
  $region4: #{_lambda_.1} parent=0 // loop_header_branch
    %15 = sbr.rel (%p13) target = $region8
  $region5: #{_lambda_.1} parent=0 // loop_body
    %s17 = ssub.s32 %s12, 1
    %s18 = ssub.s32 %s12, 2
    %s19 = sadd.s32 %s12, 1
    %s20 = ssub.s32 %s12, %s19
    %p21 = scmp.eq.s32.totalorder %s20, 0
    %s23 = sadd.s32 %s22, 1
    %s24 = scalar_select %p21, %s22, %s23
    %p27 = pneg %p21
    %p28 = scmp.eq.s32.totalorder %s12, 1
    %p29 = por %p27, %p28
    %p30 = scmp.ne.s32.totalorder %s22, %s25
    %p31 = scmp.eq.s32.totalorder %s12, 0
    %p32 = por %p30, %p31
    %p33 = scmp.ne.s32.totalorder %s22, %s25
    %p34 = scmp.eq.s32.totalorder %s17, 1
    %p35 = por %p33, %p34
    %p36 = scmp.ne.s32.totalorder %s25, %s26
    %p37 = scmp.eq.s32.totalorder %s17, 0
    %p38 = por %p36, %p37
    %p39 = scmp.ne.s32.totalorder %s25, %s26
    %p40 = scmp.eq.s32.totalorder %s18, 1
    %p41 = por %p39, %p40
    %p43 = scmp.ne.s32.totalorder %s26, %s42
    %p44 = scmp.eq.s32.totalorder %s18, 0
    %p45 = por %p43, %p44
    %s47 = sadd.s32 %s46, 1
    %p50 = scmp.eq.s32.totalorder %s12, 1
    %p51 = scmp.ne.s32.totalorder %s46, %s48
    %p52 = scmp.eq.s32.totalorder %s12, 0
    %p53 = por %p51, %p52
    %p54 = scmp.ne.s32.totalorder %s46, %s48
    %p55 = scmp.eq.s32.totalorder %s17, 1
    %p56 = por %p54, %p55
    %p57 = scmp.ne.s32.totalorder %s48, %s49
    %p58 = scmp.eq.s32.totalorder %s17, 0
    %p59 = por %p57, %p58
    %p60 = scmp.ne.s32.totalorder %s48, %s49
    %p61 = scmp.eq.s32.totalorder %s18, 1
    %p62 = por %p60, %p61
    %p64 = scmp.ne.s32.totalorder %s49, %s63
    %p65 = scmp.eq.s32.totalorder %s18, 0
    %p66 = por %p64, %p65
    %s68 = sadd.s32 %s67, 1
    %p71 = scmp.eq.s32.totalorder %s12, 1
    %p72 = scmp.ne.s32.totalorder %s67, %s69
    %p73 = scmp.eq.s32.totalorder %s12, 0
    %p74 = por %p72, %p73
    %p75 = scmp.ne.s32.totalorder %s67, %s69
    %p76 = scmp.eq.s32.totalorder %s17, 1
    %p77 = por %p75, %p76
    %p78 = scmp.ne.s32.totalorder %s69, %s70
    %p79 = scmp.eq.s32.totalorder %s17, 0
    %p80 = por %p78, %p79
    %p81 = scmp.ne.s32.totalorder %s69, %s70
    %p82 = scmp.eq.s32.totalorder %s18, 1
    %p83 = por %p81, %p82
    %p85 = scmp.ne.s32.totalorder %s70, %s84
    %p86 = scmp.eq.s32.totalorder %s18, 0
    %p87 = por %p85, %p86
    %s89 = sadd.s32 %s88, 1
    %p92 = scmp.eq.s32.totalorder %s12, 1
    %p93 = scmp.ne.s32.totalorder %s88, %s90
    %p94 = scmp.eq.s32.totalorder %s12, 0
    %p95 = por %p93, %p94
    %p96 = scmp.ne.s32.totalorder %s88, %s90
    %p97 = scmp.eq.s32.totalorder %s17, 1
    %p98 = por %p96, %p97
    %p99 = scmp.ne.s32.totalorder %s90, %s91
    %p100 = scmp.eq.s32.totalorder %s17, 0
    %p101 = por %p99, %p100
    %p102 = scmp.ne.s32.totalorder %s90, %s91
    %p103 = scmp.eq.s32.totalorder %s18, 1
    %p104 = por %p102, %p103
    %p106 = scmp.ne.s32.totalorder %s91, %s105
    %p107 = scmp.eq.s32.totalorder %s18, 0
    %p108 = por %p106, %p107
    %s110 = sadd.s32 %s109, 1
    %p113 = scmp.eq.s32.totalorder %s12, 1
    %p114 = scmp.ne.s32.totalorder %s109, %s111
    %p115 = scmp.eq.s32.totalorder %s12, 0
    %p116 = por %p114, %p115
    %p117 = scmp.ne.s32.totalorder %s109, %s111
    %p118 = scmp.eq.s32.totalorder %s17, 1
    %p119 = por %p117, %p118
    %p120 = scmp.ne.s32.totalorder %s111, %s112
    %p121 = scmp.eq.s32.totalorder %s17, 0
    %p122 = por %p120, %p121
    %p123 = scmp.ne.s32.totalorder %s111, %s112
    %p124 = scmp.eq.s32.totalorder %s18, 1
    %p125 = por %p123, %p124
    %p127 = scmp.ne.s32.totalorder %s112, %s126
    %p128 = scmp.eq.s32.totalorder %s18, 0
    %p129 = por %p127, %p128
    %s131 = sadd.s32 %s130, 1
    %p134 = scmp.eq.s32.totalorder %s12, 1
    %p135 = scmp.ne.s32.totalorder %s130, %s132
    %p136 = scmp.eq.s32.totalorder %s12, 0
    %p137 = por %p135, %p136
    %p138 = scmp.ne.s32.totalorder %s130, %s132
    %p139 = scmp.eq.s32.totalorder %s17, 1
    %p140 = por %p138, %p139
    %p141 = scmp.ne.s32.totalorder %s132, %s133
    %p142 = scmp.eq.s32.totalorder %s17, 0
    %p143 = por %p141, %p142
    %p144 = scmp.ne.s32.totalorder %s132, %s133
    %p145 = scmp.eq.s32.totalorder %s18, 1
    %p146 = por %p144, %p145
    %p148 = scmp.ne.s32.totalorder %s133, %s147
    %p149 = scmp.eq.s32.totalorder %s18, 0
    %p150 = por %p148, %p149
    %s151 = ssub.s32 %s12, %s19
    %p152 = scmp.eq.s32.totalorder %s151, 0
    %s154 = sadd.s32 %s153, 1
    %s155 = scalar_select %p152, %s153, %s154
    %p158 = pneg %p152
    %p159 = scmp.eq.s32.totalorder %s12, 1
    %p160 = por %p158, %p159
    %p161 = scmp.ne.s32.totalorder %s153, %s156
    %p162 = scmp.eq.s32.totalorder %s12, 0
    %p163 = por %p161, %p162
    %p164 = scmp.ne.s32.totalorder %s153, %s156
    %p165 = scmp.eq.s32.totalorder %s17, 1
    %p166 = por %p164, %p165
    %p167 = scmp.ne.s32.totalorder %s156, %s157
    %p168 = scmp.eq.s32.totalorder %s17, 0
    %p169 = por %p167, %p168
    %p170 = scmp.ne.s32.totalorder %s156, %s157
    %p171 = scmp.eq.s32.totalorder %s18, 1
    %p172 = por %p170, %p171
    %p174 = scmp.ne.s32.totalorder %s157, %s173
    %p175 = scmp.eq.s32.totalorder %s18, 0
    %p176 = por %p174, %p175
    %p177 = scmp.le.s32.totalorder 1, %s12
    %p178 = scmp.lt.s32.totalorder %s12, 3
    %p179 = pnand %p177, %p178
    %p180 = pneg %p179
    // Predicated region
    $region9: #{_lambda_.1} parent=5 // pred_check
      _
    $region10: #{_lambda_.1} parent=5 // pred_check_branch
      %182 = sbr.rel (%p179) target = $region12
    $region11: #{_lambda_.1} parent=5 // pred_region
      %s183 = ssub.s32 %s12, 1
      // Predicated region
      $region13: #{_lambda_.1} parent=11 // pred_check
        %p184 = pneg %p59
      $region14: #{_lambda_.1} parent=11 // pred_check_branch
        %186 = sbr.rel (%p184) target = $region16
      $region15: #{_lambda_.1} parent=11 // pred_region
        _
      $region16: #{_lambda_.1} parent=11 // pred_fallthru
        _
      // Predicated region
      $region17: #{_lambda_.1} parent=11 // pred_check
        %p187 = pneg %p80
      $region18: #{_lambda_.1} parent=11 // pred_check_branch
        %189 = sbr.rel (%p187) target = $region20
      $region19: #{_lambda_.1} parent=11 // pred_region
        _
      $region20: #{_lambda_.1} parent=11 // pred_fallthru
        _
      // Predicated region
      $region21: #{_lambda_.1} parent=11 // pred_check
        %p190 = pneg %p101
      $region22: #{_lambda_.1} parent=11 // pred_check_branch
        %192 = sbr.rel (%p190) target = $region24
      $region23: #{_lambda_.1} parent=11 // pred_region
        _
      $region24: #{_lambda_.1} parent=11 // pred_fallthru
        _
      // Predicated region
      $region25: #{_lambda_.1} parent=11 // pred_check
        %p193 = pneg %p122
      $region26: #{_lambda_.1} parent=11 // pred_check_branch
        %195 = sbr.rel (%p193) target = $region28
      $region27: #{_lambda_.1} parent=11 // pred_region
        _
      $region28: #{_lambda_.1} parent=11 // pred_fallthru
        _
      // Predicated region
      $region29: #{_lambda_.1} parent=11 // pred_check
        %p196 = pneg %p143
      $region30: #{_lambda_.1} parent=11 // pred_check_branch
        %198 = sbr.rel (%p196) target = $region32
      $region31: #{_lambda_.1} parent=11 // pred_region
        _
      $region32: #{_lambda_.1} parent=11 // pred_fallthru
        _
    $region12: #{_lambda_.1} parent=5 // pred_fallthru
      _
    %p199 = scmp.lt.s32.totalorder %s12, 2
    // Predicated region
    $region33: #{_lambda_.1} parent=5 // pred_check
      %p200 = pneg %p199
    $region34: #{_lambda_.1} parent=5 // pred_check_branch
      %202 = sbr.rel (%p200) target = $region36
    $region35: #{_lambda_.1} parent=5 // pred_region
      // Predicated region
      $region37: #{_lambda_.1} parent=35 // pred_check
        %p203 = pneg %p32
      $region38: #{_lambda_.1} parent=35 // pred_check_branch
        %205 = sbr.rel (%p203) target = $region40
      $region39: #{_lambda_.1} parent=35 // pred_region
        %p206 = scmp.lt.s32.totalorder %s12, 1
        %s207 = scalar_select %p206, %s12, 1
        %s208 = smul.addr %s207, 32
        %s209 = smul.addr %s208, 8
        %s210 = scalar_lea.vmem %s0, %s209
      $region40: #{_lambda_.1} parent=35 // pred_fallthru
        _
    $region36: #{_lambda_.1} parent=5 // pred_fallthru
      _
    %p211 = scmp.le.s32.totalorder 1, %s12
    %p212 = scmp.lt.s32.totalorder %s12, 3
    %p213 = pnand %p211, %p212
    %p214 = pneg %p213
    // Predicated region
    $region41: #{_lambda_.1} parent=5 // pred_check
      _
    $region42: #{_lambda_.1} parent=5 // pred_check_branch
      %216 = sbr.rel (%p213) target = $region44
    $region43: #{_lambda_.1} parent=5 // pred_region
      %s217 = ssub.s32 %s12, 1
      %p218 = scmp.lt.s32.totalorder %s17, 1
      %s219 = scalar_select %p218, %s17, 1
      %s220 = smul.addr %s219, 32
      %s221 = smul.addr %s220, 8
      %s222 = scalar_lea.vmem %s0, %s221
      %p223 = pneg %p38
      %p224 = pneg %p35
      %p225 = pneg %p59
      %p226 = pneg %p56
      %p227 = pneg %p80
      %p228 = pneg %p77
      %p229 = pneg %p101
      %p230 = pneg %p98
      %p231 = pneg %p122
      %p232 = pneg %p119
      %p233 = pneg %p143
      %p234 = pneg %p140
      %p235 = pneg %p169
      %p236 = pneg %p166
      %p237 = scmp.lt.s32.totalorder %s17, 1
      %s238 = scalar_select %p237, %s17, 1
      %s239 = smul.addr %s238, 8
      %s240 = smul.addr %s239, 8
      %s241 = scalar_lea.vmem %s6, %s240
      %p242 = scmp.lt.s32.totalorder %s17, 1
      %s243 = scalar_select %p242, %s17, 1
      %s244 = smul.addr %s243, 32
      %s245 = smul.addr %s244, 8
      %s246 = scalar_lea.vmem %s0, %s245
      %p247 = scmp.lt.s32.totalorder %s17, 1
      %s248 = scalar_select %p247, %s17, 1
      %s249 = smul.addr %s248, 8
      %s250 = smul.addr %s249, 8
      %s251 = scalar_lea.vmem %s6, %s250
      %v253 = vld [vmem:[%s246] sm:$0xff]
      %v254 = vld [vmem:[%s246 + $0x8] sm:$0xff]
      %v255 = vld [vmem:[%s246 + $0x10] sm:$0xff]
      %v256 = vld [vmem:[%s246 + $0x18] sm:$0xff]
      %v257 = vld [vmem:[%s246 + $0x20] sm:$0xff]
      %v258 = vld [vmem:[%s246 + $0x28] sm:$0xff]
      %v259 = vld [vmem:[%s246 + $0x30] sm:$0xff]
      %v260 = vld [vmem:[%s246 + $0x38] sm:$0xff]
      %v261 = vld [vmem:[%s246 + $0x40] sm:$0xff]
      %v262 = vld [vmem:[%s246 + $0x48] sm:$0xff]
      %v263 = vld [vmem:[%s246 + $0x50] sm:$0xff]
      %v264 = vld [vmem:[%s246 + $0x58] sm:$0xff]
      %v265 = vld [vmem:[%s246 + $0x60] sm:$0xff]
      %v266 = vld [vmem:[%s246 + $0x68] sm:$0xff]
      %v267 = vld [vmem:[%s246 + $0x70] sm:$0xff]
      %v268 = vld [vmem:[%s246 + $0x78] sm:$0xff]
      %v269 = vld [vmem:[%s246 + $0x80] sm:$0xff]
      %v270 = vld [vmem:[%s246 + $0x88] sm:$0xff]
      %v271 = vld [vmem:[%s246 + $0x90] sm:$0xff]
      %v272 = vld [vmem:[%s246 + $0x98] sm:$0xff]
      %v273 = vld [vmem:[%s246 + $0xa0] sm:$0xff]
      %v274 = vld [vmem:[%s246 + $0xa8] sm:$0xff]
      %v275 = vld [vmem:[%s246 + $0xb0] sm:$0xff]
      %v276 = vld [vmem:[%s246 + $0xb8] sm:$0xff]
      %v277 = vld [vmem:[%s246 + $0xc0] sm:$0xff]
      %v278 = vld [vmem:[%s246 + $0xc8] sm:$0xff]
      %v279 = vld [vmem:[%s246 + $0xd0] sm:$0xff]
      %v280 = vld [vmem:[%s246 + $0xd8] sm:$0xff]
      %v281 = vld [vmem:[%s246 + $0xe0] sm:$0xff]
      %v282 = vld [vmem:[%s246 + $0xe8] sm:$0xff]
      %v283 = vld [vmem:[%s246 + $0xf0] sm:$0xff]
      %v284 = vld [vmem:[%s246 + $0xf8] sm:$0xff]
      %v285 = vld [vmem:[%s2] sm:$0xff]
      %v286 = vld [vmem:[%s2 + $0x8] sm:$0xff]
      %v287 = vld [vmem:[%s2 + $0x10] sm:$0xff]
      %v288 = vld [vmem:[%s2 + $0x18] sm:$0xff]
      %v289 = vld [vmem:[%s2 + $0x20] sm:$0xff]
      %v290 = vld [vmem:[%s2 + $0x28] sm:$0xff]
      %v291 = vld [vmem:[%s2 + $0x30] sm:$0xff]
      %v292 = vld [vmem:[%s2 + $0x38] sm:$0xff]
      %v293 = vld [vmem:[%s2 + $0x40] sm:$0xff]
      %v294 = vld [vmem:[%s2 + $0x48] sm:$0xff]
      %v295 = vld [vmem:[%s2 + $0x50] sm:$0xff]
      %v296 = vld [vmem:[%s2 + $0x58] sm:$0xff]
      %v297 = vld [vmem:[%s2 + $0x60] sm:$0xff]
      %v298 = vld [vmem:[%s2 + $0x68] sm:$0xff]
      %v299 = vld [vmem:[%s2 + $0x70] sm:$0xff]
      %v300 = vld [vmem:[%s2 + $0x78] sm:$0xff]
      %302 = vset.pattern.permute.xlu0 0
      %303 = vperm.xlu0 %302, %v285
      %v304 = vpop.permute.xlu0 %303
      %307 = vset.pattern.permute.xlu0 0
      %308 = vperm.xlu0 %307, %v286
      %v309 = vpop.permute.xlu0 %308
      %312 = vset.pattern.permute.xlu0 0
      %313 = vperm.xlu0 %312, %v287
      %v314 = vpop.permute.xlu0 %313
      %317 = vset.pattern.permute.xlu0 0
      %318 = vperm.xlu0 %317, %v288
      %v319 = vpop.permute.xlu0 %318
      %322 = vset.pattern.permute.xlu0 0
      %323 = vperm.xlu0 %322, %v289
      %v324 = vpop.permute.xlu0 %323
      %327 = vset.pattern.permute.xlu0 0
      %328 = vperm.xlu0 %327, %v290
      %v329 = vpop.permute.xlu0 %328
      %332 = vset.pattern.permute.xlu0 0
      %333 = vperm.xlu0 %332, %v291
      %v334 = vpop.permute.xlu0 %333
      %337 = vset.pattern.permute.xlu0 0
      %338 = vperm.xlu0 %337, %v292
      %v339 = vpop.permute.xlu0 %338
      %342 = vset.pattern.permute.xlu0 0
      %343 = vperm.xlu0 %342, %v293
      %v344 = vpop.permute.xlu0 %343
      %347 = vset.pattern.permute.xlu0 0
      %348 = vperm.xlu0 %347, %v294
      %v349 = vpop.permute.xlu0 %348
      %352 = vset.pattern.permute.xlu0 0
      %353 = vperm.xlu0 %352, %v295
      %v354 = vpop.permute.xlu0 %353
      %357 = vset.pattern.permute.xlu0 0
      %358 = vperm.xlu0 %357, %v296
      %v359 = vpop.permute.xlu0 %358
      %362 = vset.pattern.permute.xlu0 0
      %363 = vperm.xlu0 %362, %v297
      %v364 = vpop.permute.xlu0 %363
      %367 = vset.pattern.permute.xlu0 0
      %368 = vperm.xlu0 %367, %v298
      %v369 = vpop.permute.xlu0 %368
      %372 = vset.pattern.permute.xlu0 0
      %373 = vperm.xlu0 %372, %v299
      %v374 = vpop.permute.xlu0 %373
      %377 = vset.pattern.permute.xlu0 0
      %378 = vperm.xlu0 %377, %v300
      %v379 = vpop.permute.xlu0 %378
      %v381 = vmul.f32 %v253, %v304
      %v382 = vmul.f32 %v254, %v304
      %v383 = vmul.f32 %v255, %v309
      %v384 = vmul.f32 %v256, %v309
      %v385 = vmul.f32 %v257, %v314
      %v386 = vmul.f32 %v258, %v314
      %v387 = vmul.f32 %v259, %v319
      %v388 = vmul.f32 %v260, %v319
      %v389 = vmul.f32 %v261, %v324
      %v390 = vmul.f32 %v262, %v324
      %v391 = vmul.f32 %v263, %v329
      %v392 = vmul.f32 %v264, %v329
      %v393 = vmul.f32 %v265, %v334
      %v394 = vmul.f32 %v266, %v334
      %v395 = vmul.f32 %v267, %v339
      %v396 = vmul.f32 %v268, %v339
      %v397 = vmul.f32 %v269, %v344
      %v398 = vmul.f32 %v270, %v344
      %v399 = vmul.f32 %v271, %v349
      %v400 = vmul.f32 %v272, %v349
      %v401 = vmul.f32 %v273, %v354
      %v402 = vmul.f32 %v274, %v354
      %v403 = vmul.f32 %v275, %v359
      %v404 = vmul.f32 %v276, %v359
      %v405 = vmul.f32 %v277, %v364
      %v406 = vmul.f32 %v278, %v364
      %v407 = vmul.f32 %v279, %v369
      %v408 = vmul.f32 %v280, %v369
      %v409 = vmul.f32 %v281, %v374
      %v410 = vmul.f32 %v282, %v374
      %v411 = vmul.f32 %v283, %v379
      %v412 = vmul.f32 %v284, %v379
      %v413 = vld [vmem:[%s3] sm:$0xff]
      %v414 = vld [vmem:[%s3 + $0x8] sm:$0xff]
      %v415 = vld [vmem:[%s3 + $0x10] sm:$0xff]
      %v416 = vld [vmem:[%s3 + $0x18] sm:$0xff]
      %v417 = vld [vmem:[%s3 + $0x20] sm:$0xff]
      %v418 = vld [vmem:[%s3 + $0x28] sm:$0xff]
      %v419 = vld [vmem:[%s3 + $0x30] sm:$0xff]
      %v420 = vld [vmem:[%s3 + $0x38] sm:$0xff]
      %v421 = vld [vmem:[%s3 + $0x40] sm:$0xff]
      %v422 = vld [vmem:[%s3 + $0x48] sm:$0xff]
      %v423 = vld [vmem:[%s3 + $0x50] sm:$0xff]
      %v424 = vld [vmem:[%s3 + $0x58] sm:$0xff]
      %v425 = vld [vmem:[%s3 + $0x60] sm:$0xff]
      %v426 = vld [vmem:[%s3 + $0x68] sm:$0xff]
      %v427 = vld [vmem:[%s3 + $0x70] sm:$0xff]
      %v428 = vld [vmem:[%s3 + $0x78] sm:$0xff]
      %430 = vset.pattern.permute.xlu0 0
      %431 = vperm.xlu0 %430, %v413
      %v432 = vpop.permute.xlu0 %431
      %435 = vset.pattern.permute.xlu0 0
      %436 = vperm.xlu0 %435, %v414
      %v437 = vpop.permute.xlu0 %436
      %440 = vset.pattern.permute.xlu0 0
      %441 = vperm.xlu0 %440, %v415
      %v442 = vpop.permute.xlu0 %441
      %445 = vset.pattern.permute.xlu0 0
      %446 = vperm.xlu0 %445, %v416
      %v447 = vpop.permute.xlu0 %446
      %450 = vset.pattern.permute.xlu0 0
      %451 = vperm.xlu0 %450, %v417
      %v452 = vpop.permute.xlu0 %451
      %455 = vset.pattern.permute.xlu0 0
      %456 = vperm.xlu0 %455, %v418
      %v457 = vpop.permute.xlu0 %456
      %460 = vset.pattern.permute.xlu0 0
      %461 = vperm.xlu0 %460, %v419
      %v462 = vpop.permute.xlu0 %461
      %465 = vset.pattern.permute.xlu0 0
      %466 = vperm.xlu0 %465, %v420
      %v467 = vpop.permute.xlu0 %466
      %470 = vset.pattern.permute.xlu0 0
      %471 = vperm.xlu0 %470, %v421
      %v472 = vpop.permute.xlu0 %471
      %475 = vset.pattern.permute.xlu0 0
      %476 = vperm.xlu0 %475, %v422
      %v477 = vpop.permute.xlu0 %476
      %480 = vset.pattern.permute.xlu0 0
      %481 = vperm.xlu0 %480, %v423
      %v482 = vpop.permute.xlu0 %481
      %485 = vset.pattern.permute.xlu0 0
      %486 = vperm.xlu0 %485, %v424
      %v487 = vpop.permute.xlu0 %486
      %490 = vset.pattern.permute.xlu0 0
      %491 = vperm.xlu0 %490, %v425
      %v492 = vpop.permute.xlu0 %491
      %495 = vset.pattern.permute.xlu0 0
      %496 = vperm.xlu0 %495, %v426
      %v497 = vpop.permute.xlu0 %496
      %500 = vset.pattern.permute.xlu0 0
      %501 = vperm.xlu0 %500, %v427
      %v502 = vpop.permute.xlu0 %501
      %505 = vset.pattern.permute.xlu0 0
      %506 = vperm.xlu0 %505, %v428
      %v507 = vpop.permute.xlu0 %506
      %v509 = vadd.f32 %v381, %v432
      %v510 = vadd.f32 %v382, %v432
      %v511 = vadd.f32 %v383, %v437
      %v512 = vadd.f32 %v384, %v437
      %v513 = vadd.f32 %v385, %v442
      %v514 = vadd.f32 %v386, %v442
      %v515 = vadd.f32 %v387, %v447
      %v516 = vadd.f32 %v388, %v447
      %v517 = vadd.f32 %v389, %v452
      %v518 = vadd.f32 %v390, %v452
      %v519 = vadd.f32 %v391, %v457
      %v520 = vadd.f32 %v392, %v457
      %v521 = vadd.f32 %v393, %v462
      %v522 = vadd.f32 %v394, %v462
      %v523 = vadd.f32 %v395, %v467
      %v524 = vadd.f32 %v396, %v467
      %v525 = vadd.f32 %v397, %v472
      %v526 = vadd.f32 %v398, %v472
      %v527 = vadd.f32 %v399, %v477
      %v528 = vadd.f32 %v400, %v477
      %v529 = vadd.f32 %v401, %v482
      %v530 = vadd.f32 %v402, %v482
      %v531 = vadd.f32 %v403, %v487
      %v532 = vadd.f32 %v404, %v487
      %v533 = vadd.f32 %v405, %v492
      %v534 = vadd.f32 %v406, %v492
      %v535 = vadd.f32 %v407, %v497
      %v536 = vadd.f32 %v408, %v497
      %v537 = vadd.f32 %v409, %v502
      %v538 = vadd.f32 %v410, %v502
      %v539 = vadd.f32 %v411, %v507
      %v540 = vadd.f32 %v412, %v507
      %v541 = vmax.f32 %v509, 0.0
      %v542 = vmax.f32 %v510, 0.0
      %v543 = vmax.f32 %v511, 0.0
      %v544 = vmax.f32 %v512, 0.0
      %v545 = vmax.f32 %v513, 0.0
      %v546 = vmax.f32 %v514, 0.0
      %v547 = vmax.f32 %v515, 0.0
      %v548 = vmax.f32 %v516, 0.0
      %v549 = vmax.f32 %v517, 0.0
      %v550 = vmax.f32 %v518, 0.0
      %v551 = vmax.f32 %v519, 0.0
      %v552 = vmax.f32 %v520, 0.0
      %v553 = vmax.f32 %v521, 0.0
      %v554 = vmax.f32 %v522, 0.0
      %v555 = vmax.f32 %v523, 0.0
      %v556 = vmax.f32 %v524, 0.0
      %v557 = vmax.f32 %v525, 0.0
      %v558 = vmax.f32 %v526, 0.0
      %v559 = vmax.f32 %v527, 0.0
      %v560 = vmax.f32 %v528, 0.0
      %v561 = vmax.f32 %v529, 0.0
      %v562 = vmax.f32 %v530, 0.0
      %v563 = vmax.f32 %v531, 0.0
      %v564 = vmax.f32 %v532, 0.0
      %v565 = vmax.f32 %v533, 0.0
      %v566 = vmax.f32 %v534, 0.0
      %v567 = vmax.f32 %v535, 0.0
      %v568 = vmax.f32 %v536, 0.0
      %v569 = vmax.f32 %v537, 0.0
      %v570 = vmax.f32 %v538, 0.0
      %v571 = vmax.f32 %v539, 0.0
      %v572 = vmax.f32 %v540, 0.0
      %v573 = vld [vmem:[%s1] sm:$0xf]
      %v574 = vld [vmem:[%s1 + $0x4] sm:$0xf]
      %v575 = vld [vmem:[%s1 + $0x8] sm:$0xf]
      %v576 = vld [vmem:[%s1 + $0xc] sm:$0xf]
      %v577 = vld [vmem:[%s1 + $0x10] sm:$0xf]
      %v578 = vld [vmem:[%s1 + $0x14] sm:$0xf]
      %v579 = vld [vmem:[%s1 + $0x18] sm:$0xf]
      %v580 = vld [vmem:[%s1 + $0x1c] sm:$0xf]
      %v581 = vld [vmem:[%s1 + $0x20] sm:$0xf]
      %v582 = vld [vmem:[%s1 + $0x24] sm:$0xf]
      %v583 = vld [vmem:[%s1 + $0x28] sm:$0xf]
      %v584 = vld [vmem:[%s1 + $0x2c] sm:$0xf]
      %v585 = vld [vmem:[%s1 + $0x30] sm:$0xf]
      %v586 = vld [vmem:[%s1 + $0x34] sm:$0xf]
      %v587 = vld [vmem:[%s1 + $0x38] sm:$0xf]
      %v588 = vld [vmem:[%s1 + $0x3c] sm:$0xf]
      %v589 = vpack.c.bf16 %v543, %v541
      %v590 = vpack.c.bf16 %v544, %v542
      %v591 = vpack.c.bf16 %v547, %v545
      %v592 = vpack.c.bf16 %v548, %v546
      %v593 = vpack.c.bf16 %v551, %v549
      %v594 = vpack.c.bf16 %v552, %v550
      %v595 = vpack.c.bf16 %v555, %v553
      %v596 = vpack.c.bf16 %v556, %v554
      %v597 = vpack.c.bf16 %v559, %v557
      %v598 = vpack.c.bf16 %v560, %v558
      %v599 = vpack.c.bf16 %v563, %v561
      %v600 = vpack.c.bf16 %v564, %v562
      %v601 = vpack.c.bf16 %v567, %v565
      %v602 = vpack.c.bf16 %v568, %v566
      %v603 = vpack.c.bf16 %v571, %v569
      %v604 = vpack.c.bf16 %v572, %v570
      %v605 = vld [vmem:[%s5] sm:$0xff]
      %v606 = vld [vmem:[%s5 + $0x8] sm:$0xff]
      %v607 = vld [vmem:[%s5 + $0x10] sm:$0xff]
      %v608 = vld [vmem:[%s5 + $0x18] sm:$0xff]
      %v609 = vld [vmem:[%s5 + $0x20] sm:$0xff]
      %v610 = vld [vmem:[%s5 + $0x28] sm:$0xff]
      %v611 = vld [vmem:[%s5 + $0x30] sm:$0xff]
      %v612 = vld [vmem:[%s5 + $0x38] sm:$0xff]
      %v613 = vld [vmem:[%s5 + $0x40] sm:$0xff]
      %v614 = vld [vmem:[%s5 + $0x48] sm:$0xff]
      %v615 = vld [vmem:[%s5 + $0x50] sm:$0xff]
      %v616 = vld [vmem:[%s5 + $0x58] sm:$0xff]
      %v617 = vld [vmem:[%s5 + $0x60] sm:$0xff]
      %v618 = vld [vmem:[%s5 + $0x68] sm:$0xff]
      %v619 = vld [vmem:[%s5 + $0x70] sm:$0xff]
      %v620 = vld [vmem:[%s5 + $0x78] sm:$0xff]
      %622 = vset.pattern.permute.xlu0 0
      %623 = vperm.xlu0 %622, %v605
      %v624 = vpop.permute.xlu0 %623
      %627 = vset.pattern.permute.xlu0 0
      %628 = vperm.xlu0 %627, %v606
      %v629 = vpop.permute.xlu0 %628
      %632 = vset.pattern.permute.xlu0 0
      %633 = vperm.xlu0 %632, %v607
      %v634 = vpop.permute.xlu0 %633
      %637 = vset.pattern.permute.xlu0 0
      %638 = vperm.xlu0 %637, %v608
      %v639 = vpop.permute.xlu0 %638
      %642 = vset.pattern.permute.xlu0 0
      %643 = vperm.xlu0 %642, %v609
      %v644 = vpop.permute.xlu0 %643
      %647 = vset.pattern.permute.xlu0 0
      %648 = vperm.xlu0 %647, %v610
      %v649 = vpop.permute.xlu0 %648
      %652 = vset.pattern.permute.xlu0 0
      %653 = vperm.xlu0 %652, %v611
      %v654 = vpop.permute.xlu0 %653
      %657 = vset.pattern.permute.xlu0 0
      %658 = vperm.xlu0 %657, %v612
      %v659 = vpop.permute.xlu0 %658
      %662 = vset.pattern.permute.xlu0 0
      %663 = vperm.xlu0 %662, %v613
      %v664 = vpop.permute.xlu0 %663
      %667 = vset.pattern.permute.xlu0 0
      %668 = vperm.xlu0 %667, %v614
      %v669 = vpop.permute.xlu0 %668
      %672 = vset.pattern.permute.xlu0 0
      %673 = vperm.xlu0 %672, %v615
      %v674 = vpop.permute.xlu0 %673
      %677 = vset.pattern.permute.xlu0 0
      %678 = vperm.xlu0 %677, %v616
      %v679 = vpop.permute.xlu0 %678
      %682 = vset.pattern.permute.xlu0 0
      %683 = vperm.xlu0 %682, %v617
      %v684 = vpop.permute.xlu0 %683
      %687 = vset.pattern.permute.xlu0 0
      %688 = vperm.xlu0 %687, %v618
      %v689 = vpop.permute.xlu0 %688
      %692 = vset.pattern.permute.xlu0 0
      %693 = vperm.xlu0 %692, %v619
      %v694 = vpop.permute.xlu0 %693
      %697 = vset.pattern.permute.xlu0 0
      %698 = vperm.xlu0 %697, %v620
      %v699 = vpop.permute.xlu0 %698
      %v717 = vunpack.c.l.b16 %v573
      %v718 = vunpack.c.l.b16 %v574
      %v719 = vunpack.c.l.b16 %v575
      %v720 = vunpack.c.l.b16 %v576
      %v721 = vunpack.c.l.b16 %v577
      %v722 = vunpack.c.l.b16 %v578
      %v723 = vunpack.c.l.b16 %v579
      %v724 = vunpack.c.l.b16 %v580
      %v725 = vunpack.c.l.b16 %v581
      %v726 = vunpack.c.l.b16 %v582
      %v727 = vunpack.c.l.b16 %v583
      %v728 = vunpack.c.l.b16 %v584
      %v729 = vunpack.c.l.b16 %v585
      %v730 = vunpack.c.l.b16 %v586
      %v731 = vunpack.c.l.b16 %v587
      %v732 = vunpack.c.l.b16 %v588
      %v733 = vpack.c.b16 %v718, %v717
      %v734 = vpack.c.b16 %v720, %v719
      %v735 = vpack.c.b16 %v722, %v721
      %v736 = vpack.c.b16 %v724, %v723
      %v737 = vpack.c.b16 %v726, %v725
      %v738 = vpack.c.b16 %v728, %v727
      %v739 = vpack.c.b16 %v730, %v729
      %v740 = vpack.c.b16 %v732, %v731
      %749 = vmatprep.subr.bf16.mxu0 %v604
      %750 = vmatpush1.bf16.msra.mxu0 %v603
      %751 = vmatprep.subr.bf16.mxu0 %v602
      %752 = vmatpush1.bf16.msra.mxu0 %v601
      %753 = vmatprep.subr.bf16.mxu0 %v600
      %754 = vmatpush1.bf16.msra.mxu0 %v599
      %755 = vmatprep.subr.bf16.mxu0 %v598
      %756 = vmatpush1.bf16.msra.mxu0 %v597
      %757 = vmatprep.subr.bf16.mxu0 %v596
      %758 = vmatpush1.bf16.msra.mxu0 %v595
      %759 = vmatprep.subr.bf16.mxu0 %v594
      %760 = vmatpush1.bf16.msra.mxu0 %v593
      %761 = vmatprep.subr.bf16.mxu0 %v592
      %762 = vmatpush1.bf16.msra.mxu0 %v591
      %763 = vmatprep.subr.bf16.mxu0 %v590
      %764 = vmatpush1.bf16.msra.mxu0 %v589
      %765 = vmatprep.subr.bf16.mxu0 0
      %766 = vmatpush2.bf16.msra.mxu0 0
      %767 = vmatprep.subr.bf16.mxu0 0
      %768 = vmatpush2.bf16.msra.mxu0 0
      %769 = vmatprep.subr.bf16.mxu0 0
      %770 = vmatpush2.bf16.msra.mxu0 0
      %771 = vmatprep.subr.bf16.mxu0 0
      %772 = vmatpush2.bf16.msra.mxu0 0
      %773 = vmatprep.subr.bf16.mxu0 0
      %774 = vmatpush2.bf16.msra.mxu0 0
      %775 = vmatprep.subr.bf16.mxu0 0
      %776 = vmatpush2.bf16.msra.mxu0 0
      %777 = vmatprep.subr.bf16.mxu0 0
      %778 = vmatpush2.bf16.msra.mxu0 0
      %779 = vmatprep.subr.bf16.mxu0 0
      %780 = vmatpush2.bf16.msra.mxu0 0
      %781 = vmatprep.mubr.bf16.mxu0 0
      %782 = vmatmul.mubr.bf16.gmra.mxu0 %v733
      %v783 = vpop.f32.mrf.mxu0
      %v784 = vadd.f32 %v624, %v783
      %v785 = vpop.f32.mrf.mxu0
      %v786 = vadd.f32 %v624, %v785
      %v787 = vpop.f32.mrf.mxu0
      %v788 = vadd.f32 %v629, %v787
      %v789 = vpop.f32.mrf.mxu0
      %v790 = vadd.f32 %v629, %v789
      %791 = vmatprep.mubr.bf16.mxu0 0
      %792 = vmatmul.mubr.bf16.gmra.mxu0 %v734
      %v793 = vpop.f32.mrf.mxu0
      %v794 = vadd.f32 %v634, %v793
      %v795 = vpop.f32.mrf.mxu0
      %v796 = vadd.f32 %v634, %v795
      %v797 = vpop.f32.mrf.mxu0
      %v798 = vadd.f32 %v639, %v797
      %v799 = vpop.f32.mrf.mxu0
      %v800 = vadd.f32 %v639, %v799
      %801 = vmatprep.mubr.bf16.mxu0 0
      %802 = vmatmul.mubr.bf16.gmra.mxu0 %v735
      %v803 = vpop.f32.mrf.mxu0
      %v804 = vadd.f32 %v644, %v803
      %v805 = vpop.f32.mrf.mxu0
      %v806 = vadd.f32 %v644, %v805
      %v807 = vpop.f32.mrf.mxu0
      %v808 = vadd.f32 %v649, %v807
      %v809 = vpop.f32.mrf.mxu0
      %v810 = vadd.f32 %v649, %v809
      %811 = vmatprep.mubr.bf16.mxu0 0
      %812 = vmatmul.mubr.bf16.gmra.mxu0 %v736
      %v813 = vpop.f32.mrf.mxu0
      %v814 = vadd.f32 %v654, %v813
      %v815 = vpop.f32.mrf.mxu0
      %v816 = vadd.f32 %v654, %v815
      %v817 = vpop.f32.mrf.mxu0
      %v818 = vadd.f32 %v659, %v817
      %v819 = vpop.f32.mrf.mxu0
      %v820 = vadd.f32 %v659, %v819
      %821 = vmatprep.mubr.bf16.mxu0 0
      %822 = vmatmul.mubr.bf16.gmra.mxu0 %v737
      %v823 = vpop.f32.mrf.mxu0
      %v824 = vadd.f32 %v664, %v823
      %v825 = vpop.f32.mrf.mxu0
      %v826 = vadd.f32 %v664, %v825
      %v827 = vpop.f32.mrf.mxu0
      %v828 = vadd.f32 %v669, %v827
      %v829 = vpop.f32.mrf.mxu0
      %v830 = vadd.f32 %v669, %v829
      %831 = vmatprep.mubr.bf16.mxu0 0
      %832 = vmatmul.mubr.bf16.gmra.mxu0 %v738
      %v833 = vpop.f32.mrf.mxu0
      %v834 = vadd.f32 %v674, %v833
      %v835 = vpop.f32.mrf.mxu0
      %v836 = vadd.f32 %v674, %v835
      %v837 = vpop.f32.mrf.mxu0
      %v838 = vadd.f32 %v679, %v837
      %v839 = vpop.f32.mrf.mxu0
      %v840 = vadd.f32 %v679, %v839
      %841 = vmatprep.mubr.bf16.mxu0 0
      %842 = vmatmul.mubr.bf16.gmra.mxu0 %v739
      %v843 = vpop.f32.mrf.mxu0
      %v844 = vadd.f32 %v684, %v843
      %v845 = vpop.f32.mrf.mxu0
      %v846 = vadd.f32 %v684, %v845
      %v847 = vpop.f32.mrf.mxu0
      %v848 = vadd.f32 %v689, %v847
      %v849 = vpop.f32.mrf.mxu0
      %v850 = vadd.f32 %v689, %v849
      %851 = vmatprep.mubr.bf16.mxu0 0
      %852 = vmatmul.mubr.bf16.gmra.mxu0 %v740
      %v853 = vpop.f32.mrf.mxu0
      %v854 = vadd.f32 %v694, %v853
      %v855 = vpop.f32.mrf.mxu0
      %v856 = vadd.f32 %v694, %v855
      %v857 = vpop.f32.mrf.mxu0
      %v858 = vadd.f32 %v699, %v857
      %v859 = vpop.f32.mrf.mxu0
      %v860 = vadd.f32 %v699, %v859
      %861 = vdwg.mxu0
      %v862 = vmax.f32 %v784, 0.0
      %v863 = vmax.f32 %v786, 0.0
      %v864 = vmax.f32 %v788, 0.0
      %v865 = vmax.f32 %v790, 0.0
      %v866 = vmax.f32 %v794, 0.0
      %v867 = vmax.f32 %v796, 0.0
      %v868 = vmax.f32 %v798, 0.0
      %v869 = vmax.f32 %v800, 0.0
      %v870 = vmax.f32 %v804, 0.0
      %v871 = vmax.f32 %v806, 0.0
      %v872 = vmax.f32 %v808, 0.0
      %v873 = vmax.f32 %v810, 0.0
      %v874 = vmax.f32 %v814, 0.0
      %v875 = vmax.f32 %v816, 0.0
      %v876 = vmax.f32 %v818, 0.0
      %v877 = vmax.f32 %v820, 0.0
      %v878 = vmax.f32 %v824, 0.0
      %v879 = vmax.f32 %v826, 0.0
      %v880 = vmax.f32 %v828, 0.0
      %v881 = vmax.f32 %v830, 0.0
      %v882 = vmax.f32 %v834, 0.0
      %v883 = vmax.f32 %v836, 0.0
      %v884 = vmax.f32 %v838, 0.0
      %v885 = vmax.f32 %v840, 0.0
      %v886 = vmax.f32 %v844, 0.0
      %v887 = vmax.f32 %v846, 0.0
      %v888 = vmax.f32 %v848, 0.0
      %v889 = vmax.f32 %v850, 0.0
      %v890 = vmax.f32 %v854, 0.0
      %v891 = vmax.f32 %v856, 0.0
      %v892 = vmax.f32 %v858, 0.0
      %v893 = vmax.f32 %v860, 0.0
      %v894 = vpack.c.bf16 %v864, %v862
      %v895 = vpack.c.bf16 %v865, %v863
      %v896 = vpack.c.bf16 %v868, %v866
      %v897 = vpack.c.bf16 %v869, %v867
      %v898 = vpack.c.bf16 %v872, %v870
      %v899 = vpack.c.bf16 %v873, %v871
      %v900 = vpack.c.bf16 %v876, %v874
      %v901 = vpack.c.bf16 %v877, %v875
      %v902 = vpack.c.bf16 %v880, %v878
      %v903 = vpack.c.bf16 %v881, %v879
      %v904 = vpack.c.bf16 %v884, %v882
      %v905 = vpack.c.bf16 %v885, %v883
      %v906 = vpack.c.bf16 %v888, %v886
      %v907 = vpack.c.bf16 %v889, %v887
      %v908 = vpack.c.bf16 %v892, %v890
      %v909 = vpack.c.bf16 %v893, %v891
      %v926 = vunpack.c.l.b16 %v894
      %v927 = vunpack.c.l.b16 %v895
      %v928 = vunpack.c.h.b16 %v894
      %v929 = vunpack.c.h.b16 %v895
      %v930 = vunpack.c.l.b16 %v896
      %v931 = vunpack.c.l.b16 %v897
      %v932 = vunpack.c.h.b16 %v896
      %v933 = vunpack.c.h.b16 %v897
      %v934 = vunpack.c.l.b16 %v898
      %v935 = vunpack.c.l.b16 %v899
      %v936 = vunpack.c.h.b16 %v898
      %v937 = vunpack.c.h.b16 %v899
      %v938 = vunpack.c.l.b16 %v900
      %v939 = vunpack.c.l.b16 %v901
      %v940 = vunpack.c.h.b16 %v900
      %v941 = vunpack.c.h.b16 %v901
      %v942 = vunpack.c.l.b16 %v902
      %v943 = vunpack.c.l.b16 %v903
      %v944 = vunpack.c.h.b16 %v902
      %v945 = vunpack.c.h.b16 %v903
      %v946 = vunpack.c.l.b16 %v904
      %v947 = vunpack.c.l.b16 %v905
      %v948 = vunpack.c.h.b16 %v904
      %v949 = vunpack.c.h.b16 %v905
      %v950 = vunpack.c.l.b16 %v906
      %v951 = vunpack.c.l.b16 %v907
      %v952 = vunpack.c.h.b16 %v906
      %v953 = vunpack.c.h.b16 %v907
      %v954 = vunpack.c.l.b16 %v908
      %v955 = vunpack.c.l.b16 %v909
      %v956 = vunpack.c.h.b16 %v908
      %v957 = vunpack.c.h.b16 %v909
      %v958 = vpack.c.b16 %v927, %v926
      %v959 = vpack.c.b16 %v929, %v928
      %v960 = vpack.c.b16 %v931, %v930
      %v961 = vpack.c.b16 %v933, %v932
      %v962 = vpack.c.b16 %v935, %v934
      %v963 = vpack.c.b16 %v937, %v936
      %v964 = vpack.c.b16 %v939, %v938
      %v965 = vpack.c.b16 %v941, %v940
      %v966 = vpack.c.b16 %v943, %v942
      %v967 = vpack.c.b16 %v945, %v944
      %v968 = vpack.c.b16 %v947, %v946
      %v969 = vpack.c.b16 %v949, %v948
      %v970 = vpack.c.b16 %v951, %v950
      %v971 = vpack.c.b16 %v953, %v952
      %v972 = vpack.c.b16 %v955, %v954
      %v973 = vpack.c.b16 %v957, %v956
      %990 = vst [vmem:[#allocation2] sm:$0xff] %v958
      %991 = vst [vmem:[#allocation2 + $0xc] sm:$0xff] %v959
      %992 = vst [vmem:[#allocation2 + $0x18] sm:$0xff] %v960
      %993 = vst [vmem:[#allocation2 + $0x24] sm:$0xff] %v961
      %994 = vst [vmem:[#allocation2 + $0x30] sm:$0xff] %v962
      %995 = vst [vmem:[#allocation2 + $0x3c] sm:$0xff] %v963
      %996 = vst [vmem:[#allocation2 + $0x48] sm:$0xff] %v964
      %997 = vst [vmem:[#allocation2 + $0x54] sm:$0xff] %v965
      %998 = vst [vmem:[#allocation2 + $0x60] sm:$0xff] %v966
      %999 = vst [vmem:[#allocation2 + $0x6c] sm:$0xff] %v967
      %1000 = vst [vmem:[#allocation2 + $0x78] sm:$0xff] %v968
      %1001 = vst [vmem:[#allocation2 + $0x84] sm:$0xff] %v969
      %1002 = vst [vmem:[#allocation2 + $0x90] sm:$0xff] %v970
      %1003 = vst [vmem:[#allocation2 + $0x9c] sm:$0xff] %v971
      %1004 = vst [vmem:[#allocation2 + $0xa8] sm:$0xff] %v972
      %1005 = vst [vmem:[#allocation2 + $0xb4] sm:$0xff] %v973
      %1006 = vst [vmem:[#allocation2 + $0x8] sm:$0xf] 0
      %1007 = vst [vmem:[#allocation2 + $0x14] sm:$0xf] 0
      %1008 = vst [vmem:[#allocation2 + $0x20] sm:$0xf] 0
      %1009 = vst [vmem:[#allocation2 + $0x2c] sm:$0xf] 0
      %1010 = vst [vmem:[#allocation2 + $0x38] sm:$0xf] 0
      %1011 = vst [vmem:[#allocation2 + $0x44] sm:$0xf] 0
      %1012 = vst [vmem:[#allocation2 + $0x50] sm:$0xf] 0
      %1013 = vst [vmem:[#allocation2 + $0x5c] sm:$0xf] 0
      %1014 = vst [vmem:[#allocation2 + $0x68] sm:$0xf] 0
      %1015 = vst [vmem:[#allocation2 + $0x74] sm:$0xf] 0
      %1016 = vst [vmem:[#allocation2 + $0x80] sm:$0xf] 0
      %1017 = vst [vmem:[#allocation2 + $0x8c] sm:$0xf] 0
      %1018 = vst [vmem:[#allocation2 + $0x98] sm:$0xf] 0
      %1019 = vst [vmem:[#allocation2 + $0xa4] sm:$0xf] 0
      %1020 = vst [vmem:[#allocation2 + $0xb0] sm:$0xf] 0
      %1021 = vst [vmem:[#allocation2 + $0xbc] sm:$0xf] 0
      %v1022 = vld [vmem:[%s4] sm:$0xf]
      %v1023 = vld [vmem:[%s4 + $0x4] sm:$0xf]
      %v1024 = vld [vmem:[%s4 + $0x8] sm:$0xf]
      %v1025 = vld [vmem:[%s4 + $0xc] sm:$0xf]
      %v1026 = vld [vmem:[%s4 + $0x10] sm:$0xf]
      %v1027 = vld [vmem:[%s4 + $0x14] sm:$0xf]
      %v1028 = vld [vmem:[%s4 + $0x18] sm:$0xf]
      %v1029 = vld [vmem:[%s4 + $0x1c] sm:$0xf]
      %v1030 = vld [vmem:[%s4 + $0x20] sm:$0xf]
      %v1031 = vld [vmem:[%s4 + $0x24] sm:$0xf]
      %v1032 = vld [vmem:[%s4 + $0x28] sm:$0xf]
      %v1033 = vld [vmem:[%s4 + $0x2c] sm:$0xf]
      %v1034 = vld [vmem:[%s4 + $0x30] sm:$0xf]
      %v1035 = vld [vmem:[%s4 + $0x34] sm:$0xf]
      %v1036 = vld [vmem:[%s4 + $0x38] sm:$0xf]
      %v1037 = vld [vmem:[%s4 + $0x3c] sm:$0xf]
      %v1038 = vld [vmem:[%s4 + $0x40] sm:$0xf]
      %v1039 = vld [vmem:[%s4 + $0x44] sm:$0xf]
      %v1040 = vld [vmem:[%s4 + $0x48] sm:$0xf]
      %v1041 = vld [vmem:[%s4 + $0x4c] sm:$0xf]
      %v1042 = vld [vmem:[%s4 + $0x50] sm:$0xf]
      %v1043 = vld [vmem:[%s4 + $0x54] sm:$0xf]
      %v1044 = vld [vmem:[%s4 + $0x58] sm:$0xf]
      %v1045 = vld [vmem:[%s4 + $0x5c] sm:$0xf]
      %v1046 = vld [vmem:[%s4 + $0x60] sm:$0xf]
      %v1047 = vld [vmem:[%s4 + $0x64] sm:$0xf]
      %v1048 = vld [vmem:[%s4 + $0x68] sm:$0xf]
      %v1049 = vld [vmem:[%s4 + $0x6c] sm:$0xf]
      %v1050 = vld [vmem:[%s4 + $0x70] sm:$0xf]
      %v1051 = vld [vmem:[%s4 + $0x74] sm:$0xf]
      %v1052 = vld [vmem:[%s4 + $0x78] sm:$0xf]
      %v1053 = vld [vmem:[%s4 + $0x7c] sm:$0xf]
      %v1054 = vld [vmem:[%s4 + $0x80] sm:$0xf]
      %v1055 = vld [vmem:[%s4 + $0x84] sm:$0xf]
      %v1056 = vld [vmem:[%s4 + $0x88] sm:$0xf]
      %v1057 = vld [vmem:[%s4 + $0x8c] sm:$0xf]
      %v1058 = vld [vmem:[#allocation2] sm:$0xff]
      %v1059 = vld [vmem:[#allocation2 + $0x8] sm:$0xf]
      %v1060 = vld [vmem:[#allocation2 + $0xc] sm:$0xff]
      %v1061 = vld [vmem:[#allocation2 + $0x14] sm:$0xf]
      %v1062 = vld [vmem:[#allocation2 + $0x18] sm:$0xff]
      %v1063 = vld [vmem:[#allocation2 + $0x20] sm:$0xf]
      %v1064 = vld [vmem:[#allocation2 + $0x24] sm:$0xff]
      %v1065 = vld [vmem:[#allocation2 + $0x2c] sm:$0xf]
      %v1066 = vld [vmem:[#allocation2 + $0x30] sm:$0xff]
      %v1067 = vld [vmem:[#allocation2 + $0x38] sm:$0xf]
      %v1068 = vld [vmem:[#allocation2 + $0x3c] sm:$0xff]
      %v1069 = vld [vmem:[#allocation2 + $0x44] sm:$0xf]
      %v1070 = vld [vmem:[#allocation2 + $0x48] sm:$0xff]
      %v1071 = vld [vmem:[#allocation2 + $0x50] sm:$0xf]
      %v1072 = vld [vmem:[#allocation2 + $0x54] sm:$0xff]
      %v1073 = vld [vmem:[#allocation2 + $0x5c] sm:$0xf]
      %v1074 = vld [vmem:[#allocation2 + $0x60] sm:$0xff]
      %v1075 = vld [vmem:[#allocation2 + $0x68] sm:$0xf]
      %v1076 = vld [vmem:[#allocation2 + $0x6c] sm:$0xff]
      %v1077 = vld [vmem:[#allocation2 + $0x74] sm:$0xf]
      %v1078 = vld [vmem:[#allocation2 + $0x78] sm:$0xff]
      %v1079 = vld [vmem:[#allocation2 + $0x80] sm:$0xf]
      %v1080 = vld [vmem:[#allocation2 + $0x84] sm:$0xff]
      %v1081 = vld [vmem:[#allocation2 + $0x8c] sm:$0xf]
      %v1082 = vld [vmem:[#allocation2 + $0x90] sm:$0xff]
      %v1083 = vld [vmem:[#allocation2 + $0x98] sm:$0xf]
      %v1084 = vld [vmem:[#allocation2 + $0x9c] sm:$0xff]
      %v1085 = vld [vmem:[#allocation2 + $0xa4] sm:$0xf]
      %v1086 = vld [vmem:[#allocation2 + $0xa8] sm:$0xff]
      %v1087 = vld [vmem:[#allocation2 + $0xb0] sm:$0xf]
      %v1088 = vld [vmem:[#allocation2 + $0xb4] sm:$0xff]
      %v1089 = vld [vmem:[#allocation2 + $0xbc] sm:$0xf]
      %v1126 = vunpack.c.l.b16 %v1022
      %v1127 = vunpack.c.l.b16 %v1023
      %v1128 = vunpack.c.l.b16 %v1024
      %v1129 = vunpack.c.l.b16 %v1025
      %v1130 = vunpack.c.l.b16 %v1026
      %v1131 = vunpack.c.l.b16 %v1027
      %v1132 = vunpack.c.l.b16 %v1028
      %v1133 = vunpack.c.l.b16 %v1029
      %v1134 = vunpack.c.l.b16 %v1030
      %v1135 = vunpack.c.l.b16 %v1031
      %v1136 = vunpack.c.l.b16 %v1032
      %v1137 = vunpack.c.l.b16 %v1033
      %v1138 = vunpack.c.l.b16 %v1034
      %v1139 = vunpack.c.l.b16 %v1035
      %v1140 = vunpack.c.l.b16 %v1036
      %v1141 = vunpack.c.l.b16 %v1037
      %v1142 = vunpack.c.l.b16 %v1038
      %v1143 = vunpack.c.l.b16 %v1039
      %v1144 = vunpack.c.l.b16 %v1040
      %v1145 = vunpack.c.l.b16 %v1041
      %v1146 = vunpack.c.l.b16 %v1042
      %v1147 = vunpack.c.l.b16 %v1043
      %v1148 = vunpack.c.l.b16 %v1044
      %v1149 = vunpack.c.l.b16 %v1045
      %v1150 = vunpack.c.l.b16 %v1046
      %v1151 = vunpack.c.l.b16 %v1047
      %v1152 = vunpack.c.l.b16 %v1048
      %v1153 = vunpack.c.l.b16 %v1049
      %v1154 = vunpack.c.l.b16 %v1050
      %v1155 = vunpack.c.l.b16 %v1051
      %v1156 = vunpack.c.l.b16 %v1052
      %v1157 = vunpack.c.l.b16 %v1053
      %v1158 = vunpack.c.l.b16 %v1054
      %v1159 = vunpack.c.l.b16 %v1055
      %v1160 = vunpack.c.l.b16 %v1056
      %v1161 = vunpack.c.l.b16 %v1057
      %v1162 = vpack.c.b16 %v1127, %v1126
      %v1163 = vpack.c.b16 %v1129, %v1128
      %v1164 = vpack.c.b16 %v1131, %v1130
      %v1165 = vpack.c.b16 %v1133, %v1132
      %v1166 = vpack.c.b16 %v1135, %v1134
      %v1167 = vpack.c.b16 %v1137, %v1136
      %v1168 = vpack.c.b16 %v1139, %v1138
      %v1169 = vpack.c.b16 %v1141, %v1140
      %v1170 = vpack.c.b16 %v1143, %v1142
      %v1171 = vpack.c.b16 %v1145, %v1144
      %v1172 = vpack.c.b16 %v1147, %v1146
      %v1173 = vpack.c.b16 %v1149, %v1148
      %v1174 = vpack.c.b16 %v1151, %v1150
      %v1175 = vpack.c.b16 %v1153, %v1152
      %v1176 = vpack.c.b16 %v1155, %v1154
      %v1177 = vpack.c.b16 %v1157, %v1156
      %v1178 = vpack.c.b16 %v1159, %v1158
      %v1179 = vpack.c.b16 %v1161, %v1160
      %v1230 = vunpack.c.l.b16 %v1058
      %v1231 = vunpack.c.h.b16 %v1058
      %v1232 = vunpack.c.l.b16 %v1059
      %v1233 = vunpack.c.l.b16 %v1060
      %v1234 = vunpack.c.h.b16 %v1060
      %v1235 = vunpack.c.l.b16 %v1061
      %v1236 = vunpack.c.l.b16 %v1062
      %v1237 = vunpack.c.h.b16 %v1062
      %v1238 = vunpack.c.l.b16 %v1063
      %v1239 = vunpack.c.l.b16 %v1064
      %v1240 = vunpack.c.h.b16 %v1064
      %v1241 = vunpack.c.l.b16 %v1065
      %v1242 = vunpack.c.l.b16 %v1066
      %v1243 = vunpack.c.h.b16 %v1066
      %v1244 = vunpack.c.l.b16 %v1067
      %v1245 = vunpack.c.l.b16 %v1068
      %v1246 = vunpack.c.h.b16 %v1068
      %v1247 = vunpack.c.l.b16 %v1069
      %v1248 = vunpack.c.l.b16 %v1070
      %v1249 = vunpack.c.h.b16 %v1070
      %v1250 = vunpack.c.l.b16 %v1071
      %v1251 = vunpack.c.l.b16 %v1072
      %v1252 = vunpack.c.h.b16 %v1072
      %v1253 = vunpack.c.l.b16 %v1073
      %v1254 = vunpack.c.l.b16 %v1074
      %v1255 = vunpack.c.h.b16 %v1074
      %v1256 = vunpack.c.l.b16 %v1075
      %v1257 = vunpack.c.l.b16 %v1076
      %v1258 = vunpack.c.h.b16 %v1076
      %v1259 = vunpack.c.l.b16 %v1077
      %v1260 = vunpack.c.l.b16 %v1078
      %v1261 = vunpack.c.h.b16 %v1078
      %v1262 = vunpack.c.l.b16 %v1079
      %v1263 = vunpack.c.l.b16 %v1080
      %v1264 = vunpack.c.h.b16 %v1080
      %v1265 = vunpack.c.l.b16 %v1081
      %v1266 = vunpack.c.l.b16 %v1082
      %v1267 = vunpack.c.h.b16 %v1082
      %v1268 = vunpack.c.l.b16 %v1083
      %v1269 = vunpack.c.l.b16 %v1084
      %v1270 = vunpack.c.h.b16 %v1084
      %v1271 = vunpack.c.l.b16 %v1085
      %v1272 = vunpack.c.l.b16 %v1086
      %v1273 = vunpack.c.h.b16 %v1086
      %v1274 = vunpack.c.l.b16 %v1087
      %v1275 = vunpack.c.l.b16 %v1088
      %v1276 = vunpack.c.h.b16 %v1088
      %v1277 = vunpack.c.l.b16 %v1089
      %v1278 = vpack.c.b16 %v1233, %v1230
      %v1279 = vpack.c.b16 %v1234, %v1231
      %v1280 = vpack.c.b16 %v1235, %v1232
      %v1281 = vpack.c.b16 %v1239, %v1236
      %v1282 = vpack.c.b16 %v1240, %v1237
      %v1283 = vpack.c.b16 %v1241, %v1238
      %v1284 = vpack.c.b16 %v1245, %v1242
      %v1285 = vpack.c.b16 %v1246, %v1243
      %v1286 = vpack.c.b16 %v1247, %v1244
      %v1287 = vpack.c.b16 %v1251, %v1248
      %v1288 = vpack.c.b16 %v1252, %v1249
      %v1289 = vpack.c.b16 %v1253, %v1250
      %v1290 = vpack.c.b16 %v1257, %v1254
      %v1291 = vpack.c.b16 %v1258, %v1255
      %v1292 = vpack.c.b16 %v1259, %v1256
      %v1293 = vpack.c.b16 %v1263, %v1260
      %v1294 = vpack.c.b16 %v1264, %v1261
      %v1295 = vpack.c.b16 %v1265, %v1262
      %v1296 = vpack.c.b16 %v1269, %v1266
      %v1297 = vpack.c.b16 %v1270, %v1267
      %v1298 = vpack.c.b16 %v1271, %v1268
      %v1299 = vpack.c.b16 %v1275, %v1272
      %v1300 = vpack.c.b16 %v1276, %v1273
      %v1301 = vpack.c.b16 %v1277, %v1274
      %1326 = vmatprep.subr.bf16.mxu0 %v1300
      %1327 = vmatpush1.bf16.msra.mxu0 %v1299
      %1328 = vmatprep.subr.bf16.mxu0 %v1297
      %1329 = vmatpush1.bf16.msra.mxu0 %v1296
      %1330 = vmatprep.subr.bf16.mxu0 %v1294
      %1331 = vmatpush1.bf16.msra.mxu0 %v1293
      %1332 = vmatprep.subr.bf16.mxu0 %v1291
      %1333 = vmatpush1.bf16.msra.mxu0 %v1290
      %1334 = vmatprep.subr.bf16.mxu0 %v1288
      %1335 = vmatpush1.bf16.msra.mxu0 %v1287
      %1336 = vmatprep.subr.bf16.mxu0 %v1285
      %1337 = vmatpush1.bf16.msra.mxu0 %v1284
      %1338 = vmatprep.subr.bf16.mxu0 %v1282
      %1339 = vmatpush1.bf16.msra.mxu0 %v1281
      %1340 = vmatprep.subr.bf16.mxu0 %v1279
      %1341 = vmatpush1.bf16.msra.mxu0 %v1278
      %1342 = vmatprep.subr.bf16.mxu0 0
      %1343 = vmatpush2.bf16.msra.mxu0 0
      %1344 = vmatprep.subr.bf16.mxu0 0
      %1345 = vmatpush2.bf16.msra.mxu0 0
      %1346 = vmatprep.subr.bf16.mxu0 0
      %1347 = vmatpush2.bf16.msra.mxu0 0
      %1348 = vmatprep.subr.bf16.mxu0 0
      %1349 = vmatpush2.bf16.msra.mxu0 0
      %1350 = vmatprep.subr.bf16.mxu0 0
      %1351 = vmatpush2.bf16.msra.mxu0 0
      %1352 = vmatprep.subr.bf16.mxu0 0
      %1353 = vmatpush2.bf16.msra.mxu0 0
      %1354 = vmatprep.subr.bf16.mxu0 0
      %1355 = vmatpush2.bf16.msra.mxu0 0
      %1356 = vmatprep.subr.bf16.mxu0 0
      %1357 = vmatpush2.bf16.msra.mxu0 0
      %1358 = vmatprep.mubr.bf16.mxu0 0
      %1359 = vmatmul.mubr.bf16.gmra.mxu0 %v1162
      %v1360 = vpop.f32.mrf.mxu0
      %v1361 = vadd.f32 0.0, %v1360
      %v1362 = vpop.f32.mrf.mxu0
      %v1363 = vadd.f32 0.0, %v1362
      %v1364 = vpop.f32.mrf.mxu0
      %v1365 = vadd.f32 0.0, %v1364
      %v1366 = vpop.f32.mrf.mxu0
      %v1367 = vadd.f32 0.0, %v1366
      %1368 = vmatprep.mubr.bf16.mxu0 0
      %1369 = vmatmul.mubr.bf16.gmra.mxu0 %v1163
      %v1370 = vpop.f32.mrf.mxu0
      %v1371 = vadd.f32 0.0, %v1370
      %v1372 = vpop.f32.mrf.mxu0
      %v1373 = vadd.f32 0.0, %v1372
      %v1374 = vpop.f32.mrf.mxu0
      %v1375 = vadd.f32 0.0, %v1374
      %v1376 = vpop.f32.mrf.mxu0
      %v1377 = vadd.f32 0.0, %v1376
      %1378 = vmatprep.mubr.bf16.mxu0 0
      %1379 = vmatmul.mubr.bf16.gmra.mxu0 %v1164
      %v1380 = vpop.f32.mrf.mxu0
      %v1381 = vadd.f32 0.0, %v1380
      %v1382 = vpop.f32.mrf.mxu0
      %v1383 = vadd.f32 0.0, %v1382
      %v1384 = vpop.f32.mrf.mxu0
      %v1385 = vadd.f32 0.0, %v1384
      %v1386 = vpop.f32.mrf.mxu0
      %v1387 = vadd.f32 0.0, %v1386
      %1388 = vmatprep.mubr.bf16.mxu0 0
      %1389 = vmatmul.mubr.bf16.gmra.mxu0 %v1165
      %v1390 = vpop.f32.mrf.mxu0
      %v1391 = vadd.f32 0.0, %v1390
      %v1392 = vpop.f32.mrf.mxu0
      %v1393 = vadd.f32 0.0, %v1392
      %v1394 = vpop.f32.mrf.mxu0
      %v1395 = vadd.f32 0.0, %v1394
      %v1396 = vpop.f32.mrf.mxu0
      %v1397 = vadd.f32 0.0, %v1396
      %1398 = vmatprep.mubr.bf16.mxu0 0
      %1399 = vmatmul.mubr.bf16.gmra.mxu0 %v1166
      %v1400 = vpop.f32.mrf.mxu0
      %v1401 = vadd.f32 0.0, %v1400
      %v1402 = vpop.f32.mrf.mxu0
      %v1403 = vadd.f32 0.0, %v1402
      %v1404 = vpop.f32.mrf.mxu0
      %v1405 = vadd.f32 0.0, %v1404
      %v1406 = vpop.f32.mrf.mxu0
      %v1407 = vadd.f32 0.0, %v1406
      %1408 = vmatprep.mubr.bf16.mxu0 0
      %1409 = vmatmul.mubr.bf16.gmra.mxu0 %v1167
      %v1410 = vpop.f32.mrf.mxu0
      %v1411 = vadd.f32 0.0, %v1410
      %v1412 = vpop.f32.mrf.mxu0
      %v1413 = vadd.f32 0.0, %v1412
      %v1414 = vpop.f32.mrf.mxu0
      %v1415 = vadd.f32 0.0, %v1414
      %v1416 = vpop.f32.mrf.mxu0
      %v1417 = vadd.f32 0.0, %v1416
      %1418 = vmatprep.mubr.bf16.mxu0 0
      %1419 = vmatmul.mubr.bf16.gmra.mxu0 %v1168
      %v1420 = vpop.f32.mrf.mxu0
      %v1421 = vadd.f32 0.0, %v1420
      %v1422 = vpop.f32.mrf.mxu0
      %v1423 = vadd.f32 0.0, %v1422
      %v1424 = vpop.f32.mrf.mxu0
      %v1425 = vadd.f32 0.0, %v1424
      %v1426 = vpop.f32.mrf.mxu0
      %v1427 = vadd.f32 0.0, %v1426
      %1428 = vmatprep.mubr.bf16.mxu0 0
      %1429 = vmatmul.mubr.bf16.gmra.mxu0 %v1169
      %v1430 = vpop.f32.mrf.mxu0
      %v1431 = vadd.f32 0.0, %v1430
      %v1432 = vpop.f32.mrf.mxu0
      %v1433 = vadd.f32 0.0, %v1432
      %v1434 = vpop.f32.mrf.mxu0
      %v1435 = vadd.f32 0.0, %v1434
      %v1436 = vpop.f32.mrf.mxu0
      %v1437 = vadd.f32 0.0, %v1436
      %1438 = vmatprep.mubr.bf16.mxu0 0
      %1439 = vmatmul.mubr.bf16.gmra.mxu0 %v1170
      %v1440 = vpop.f32.mrf.mxu0
      %v1441 = vadd.f32 0.0, %v1440
      %v1442 = vpop.f32.mrf.mxu0
      %v1443 = vadd.f32 0.0, %v1442
      %v1444 = vpop.f32.mrf.mxu0
      %v1445 = vadd.f32 0.0, %v1444
      %v1446 = vpop.f32.mrf.mxu0
      %v1447 = vadd.f32 0.0, %v1446
      %1448 = vmatprep.mubr.bf16.mxu0 0
      %1449 = vmatmul.mubr.bf16.gmra.mxu0 %v1171
      %v1450 = vpop.f32.mrf.mxu0
      %v1451 = vadd.f32 0.0, %v1450
      %v1452 = vpop.f32.mrf.mxu0
      %v1453 = vadd.f32 0.0, %v1452
      %v1454 = vpop.f32.mrf.mxu0
      %v1455 = vadd.f32 0.0, %v1454
      %v1456 = vpop.f32.mrf.mxu0
      %v1457 = vadd.f32 0.0, %v1456
      %1458 = vmatprep.mubr.bf16.mxu0 0
      %1459 = vmatmul.mubr.bf16.gmra.mxu0 %v1172
      %v1460 = vpop.f32.mrf.mxu0
      %v1461 = vadd.f32 0.0, %v1460
      %v1462 = vpop.f32.mrf.mxu0
      %v1463 = vadd.f32 0.0, %v1462
      %v1464 = vpop.f32.mrf.mxu0
      %v1465 = vadd.f32 0.0, %v1464
      %v1466 = vpop.f32.mrf.mxu0
      %v1467 = vadd.f32 0.0, %v1466
      %1468 = vmatprep.mubr.bf16.mxu0 0
      %1469 = vmatmul.mubr.bf16.gmra.mxu0 %v1173
      %v1470 = vpop.f32.mrf.mxu0
      %v1471 = vadd.f32 0.0, %v1470
      %v1472 = vpop.f32.mrf.mxu0
      %v1473 = vadd.f32 0.0, %v1472
      %v1474 = vpop.f32.mrf.mxu0
      %v1475 = vadd.f32 0.0, %v1474
      %v1476 = vpop.f32.mrf.mxu0
      %v1477 = vadd.f32 0.0, %v1476
      %1478 = vmatprep.mubr.bf16.mxu0 0
      %1479 = vmatmul.mubr.bf16.gmra.mxu0 %v1174
      %v1480 = vpop.f32.mrf.mxu0
      %v1481 = vadd.f32 0.0, %v1480
      %v1482 = vpop.f32.mrf.mxu0
      %v1483 = vadd.f32 0.0, %v1482
      %v1484 = vpop.f32.mrf.mxu0
      %v1485 = vadd.f32 0.0, %v1484
      %v1486 = vpop.f32.mrf.mxu0
      %v1487 = vadd.f32 0.0, %v1486
      %1488 = vmatprep.mubr.bf16.mxu0 0
      %1489 = vmatmul.mubr.bf16.gmra.mxu0 %v1175
      %v1490 = vpop.f32.mrf.mxu0
      %v1491 = vadd.f32 0.0, %v1490
      %v1492 = vpop.f32.mrf.mxu0
      %v1493 = vadd.f32 0.0, %v1492
      %v1494 = vpop.f32.mrf.mxu0
      %v1495 = vadd.f32 0.0, %v1494
      %v1496 = vpop.f32.mrf.mxu0
      %v1497 = vadd.f32 0.0, %v1496
      %1498 = vmatprep.mubr.bf16.mxu0 0
      %1499 = vmatmul.mubr.bf16.gmra.mxu0 %v1176
      %v1500 = vpop.f32.mrf.mxu0
      %v1501 = vadd.f32 0.0, %v1500
      %v1502 = vpop.f32.mrf.mxu0
      %v1503 = vadd.f32 0.0, %v1502
      %v1504 = vpop.f32.mrf.mxu0
      %v1505 = vadd.f32 0.0, %v1504
      %v1506 = vpop.f32.mrf.mxu0
      %v1507 = vadd.f32 0.0, %v1506
      %1508 = vmatprep.mubr.bf16.mxu0 0
      %1509 = vmatmul.mubr.bf16.gmra.mxu0 %v1177
      %v1510 = vpop.f32.mrf.mxu0
      %v1511 = vadd.f32 0.0, %v1510
      %v1512 = vpop.f32.mrf.mxu0
      %v1513 = vadd.f32 0.0, %v1512
      %v1514 = vpop.f32.mrf.mxu0
      %v1515 = vadd.f32 0.0, %v1514
      %v1516 = vpop.f32.mrf.mxu0
      %v1517 = vadd.f32 0.0, %v1516
      %1518 = vmatprep.mubr.bf16.mxu0 0
      %1519 = vmatmul.mubr.bf16.gmra.mxu0 %v1178
      %v1520 = vpop.f32.mrf.mxu0
      %v1521 = vadd.f32 0.0, %v1520
      %v1522 = vpop.f32.mrf.mxu0
      %v1523 = vadd.f32 0.0, %v1522
      %v1524 = vpop.f32.mrf.mxu0
      %v1525 = vadd.f32 0.0, %v1524
      %v1526 = vpop.f32.mrf.mxu0
      %v1527 = vadd.f32 0.0, %v1526
      %1528 = vmatprep.mubr.bf16.mxu0 0
      %1529 = vmatmul.mubr.bf16.gmra.mxu0 %v1179
      %v1530 = vpop.f32.mrf.mxu0
      %v1531 = vadd.f32 0.0, %v1530
      %v1532 = vpop.f32.mrf.mxu0
      %v1533 = vadd.f32 0.0, %v1532
      %v1534 = vpop.f32.mrf.mxu0
      %v1535 = vadd.f32 0.0, %v1534
      %v1536 = vpop.f32.mrf.mxu0
      %v1537 = vadd.f32 0.0, %v1536
      %1538 = vdwg.mxu0
      %1539 = vmatprep.subr.bf16.mxu0 0
      %1540 = vmatpush1.bf16.msra.mxu0 %v1301
      %1541 = vmatprep.subr.bf16.mxu0 0
      %1542 = vmatpush1.bf16.msra.mxu0 %v1298
      %1543 = vmatprep.subr.bf16.mxu0 0
      %1544 = vmatpush1.bf16.msra.mxu0 %v1295
      %1545 = vmatprep.subr.bf16.mxu0 0
      %1546 = vmatpush1.bf16.msra.mxu0 %v1292
      %1547 = vmatprep.subr.bf16.mxu0 0
      %1548 = vmatpush1.bf16.msra.mxu0 %v1289
      %1549 = vmatprep.subr.bf16.mxu0 0
      %1550 = vmatpush1.bf16.msra.mxu0 %v1286
      %1551 = vmatprep.subr.bf16.mxu0 0
      %1552 = vmatpush1.bf16.msra.mxu0 %v1283
      %1553 = vmatprep.subr.bf16.mxu0 0
      %1554 = vmatpush1.bf16.msra.mxu0 %v1280
      %1555 = vmatprep.subr.bf16.mxu0 0
      %1556 = vmatpush2.bf16.msra.mxu0 0
      %1557 = vmatprep.subr.bf16.mxu0 0
      %1558 = vmatpush2.bf16.msra.mxu0 0
      %1559 = vmatprep.subr.bf16.mxu0 0
      %1560 = vmatpush2.bf16.msra.mxu0 0
      %1561 = vmatprep.subr.bf16.mxu0 0
      %1562 = vmatpush2.bf16.msra.mxu0 0
      %1563 = vmatprep.subr.bf16.mxu0 0
      %1564 = vmatpush2.bf16.msra.mxu0 0
      %1565 = vmatprep.subr.bf16.mxu0 0
      %1566 = vmatpush2.bf16.msra.mxu0 0
      %1567 = vmatprep.subr.bf16.mxu0 0
      %1568 = vmatpush2.bf16.msra.mxu0 0
      %1569 = vmatprep.subr.bf16.mxu0 0
      %1570 = vmatpush2.bf16.msra.mxu0 0
      %1571 = vmatprep.mubr.bf16.mxu0 0
      %1572 = vmatmul.mubr.bf16.gmra.mxu0 %v1162
      %v1573 = vpop.f32.mrf.mxu0
      %v1574 = vadd.f32 0.0, %v1573
      %v1575 = vpop.f32.mrf.mxu0
      %v1576 = vpop.f32.mrf.mxu0
      %v1577 = vadd.f32 0.0, %v1576
      %v1578 = vpop.f32.mrf.mxu0
      %1579 = vmatprep.mubr.bf16.mxu0 0
      %1580 = vmatmul.mubr.bf16.gmra.mxu0 %v1163
      %v1581 = vpop.f32.mrf.mxu0
      %v1582 = vadd.f32 0.0, %v1581
      %v1583 = vpop.f32.mrf.mxu0
      %v1584 = vpop.f32.mrf.mxu0
      %v1585 = vadd.f32 0.0, %v1584
      %v1586 = vpop.f32.mrf.mxu0
      %1587 = vmatprep.mubr.bf16.mxu0 0
      %1588 = vmatmul.mubr.bf16.gmra.mxu0 %v1164
      %v1589 = vpop.f32.mrf.mxu0
      %v1590 = vadd.f32 0.0, %v1589
      %v1591 = vpop.f32.mrf.mxu0
      %v1592 = vpop.f32.mrf.mxu0
      %v1593 = vadd.f32 0.0, %v1592
      %v1594 = vpop.f32.mrf.mxu0
      %1595 = vmatprep.mubr.bf16.mxu0 0
      %1596 = vmatmul.mubr.bf16.gmra.mxu0 %v1165
      %v1597 = vpop.f32.mrf.mxu0
      %v1598 = vadd.f32 0.0, %v1597
      %v1599 = vpop.f32.mrf.mxu0
      %v1600 = vpop.f32.mrf.mxu0
      %v1601 = vadd.f32 0.0, %v1600
      %v1602 = vpop.f32.mrf.mxu0
      %1603 = vmatprep.mubr.bf16.mxu0 0
      %1604 = vmatmul.mubr.bf16.gmra.mxu0 %v1166
      %v1605 = vpop.f32.mrf.mxu0
      %v1606 = vadd.f32 0.0, %v1605
      %v1607 = vpop.f32.mrf.mxu0
      %v1608 = vpop.f32.mrf.mxu0
      %v1609 = vadd.f32 0.0, %v1608
      %v1610 = vpop.f32.mrf.mxu0
      %1611 = vmatprep.mubr.bf16.mxu0 0
      %1612 = vmatmul.mubr.bf16.gmra.mxu0 %v1167
      %v1613 = vpop.f32.mrf.mxu0
      %v1614 = vadd.f32 0.0, %v1613
      %v1615 = vpop.f32.mrf.mxu0
      %v1616 = vpop.f32.mrf.mxu0
      %v1617 = vadd.f32 0.0, %v1616
      %v1618 = vpop.f32.mrf.mxu0
      %1619 = vmatprep.mubr.bf16.mxu0 0
      %1620 = vmatmul.mubr.bf16.gmra.mxu0 %v1168
      %v1621 = vpop.f32.mrf.mxu0
      %v1622 = vadd.f32 0.0, %v1621
      %v1623 = vpop.f32.mrf.mxu0
      %v1624 = vpop.f32.mrf.mxu0
      %v1625 = vadd.f32 0.0, %v1624
      %v1626 = vpop.f32.mrf.mxu0
      %1627 = vmatprep.mubr.bf16.mxu0 0
      %1628 = vmatmul.mubr.bf16.gmra.mxu0 %v1169
      %v1629 = vpop.f32.mrf.mxu0
      %v1630 = vadd.f32 0.0, %v1629
      %v1631 = vpop.f32.mrf.mxu0
      %v1632 = vpop.f32.mrf.mxu0
      %v1633 = vadd.f32 0.0, %v1632
      %v1634 = vpop.f32.mrf.mxu0
      %1635 = vmatprep.mubr.bf16.mxu0 0
      %1636 = vmatmul.mubr.bf16.gmra.mxu0 %v1170
      %v1637 = vpop.f32.mrf.mxu0
      %v1638 = vpop.f32.mrf.mxu0
      %v1639 = vpop.f32.mrf.mxu0
      %v1640 = vpop.f32.mrf.mxu0
      %1641 = vmatprep.mubr.bf16.mxu0 0
      %1642 = vmatmul.mubr.bf16.gmra.mxu0 %v1171
      %v1643 = vpop.f32.mrf.mxu0
      %v1644 = vpop.f32.mrf.mxu0
      %v1645 = vpop.f32.mrf.mxu0
      %v1646 = vpop.f32.mrf.mxu0
      %1647 = vmatprep.mubr.bf16.mxu0 0
      %1648 = vmatmul.mubr.bf16.gmra.mxu0 %v1172
      %v1649 = vpop.f32.mrf.mxu0
      %v1650 = vadd.f32 0.0, %v1649
      %v1651 = vpop.f32.mrf.mxu0
      %v1652 = vpop.f32.mrf.mxu0
      %v1653 = vadd.f32 0.0, %v1652
      %v1654 = vpop.f32.mrf.mxu0
      %1655 = vmatprep.mubr.bf16.mxu0 0
      %1656 = vmatmul.mubr.bf16.gmra.mxu0 %v1173
      %v1657 = vpop.f32.mrf.mxu0
      %v1658 = vadd.f32 0.0, %v1657
      %v1659 = vpop.f32.mrf.mxu0
      %v1660 = vpop.f32.mrf.mxu0
      %v1661 = vadd.f32 0.0, %v1660
      %v1662 = vpop.f32.mrf.mxu0
      %1663 = vmatprep.mubr.bf16.mxu0 0
      %1664 = vmatmul.mubr.bf16.gmra.mxu0 %v1174
      %v1665 = vpop.f32.mrf.mxu0
      %v1666 = vadd.f32 0.0, %v1665
      %v1667 = vpop.f32.mrf.mxu0
      %v1668 = vpop.f32.mrf.mxu0
      %v1669 = vadd.f32 0.0, %v1668
      %v1670 = vpop.f32.mrf.mxu0
      %1671 = vmatprep.mubr.bf16.mxu0 0
      %1672 = vmatmul.mubr.bf16.gmra.mxu0 %v1175
      %v1673 = vpop.f32.mrf.mxu0
      %v1674 = vadd.f32 0.0, %v1673
      %v1675 = vpop.f32.mrf.mxu0
      %v1676 = vpop.f32.mrf.mxu0
      %v1677 = vadd.f32 0.0, %v1676
      %v1678 = vpop.f32.mrf.mxu0
      %1679 = vmatprep.mubr.bf16.mxu0 0
      %1680 = vmatmul.mubr.bf16.gmra.mxu0 %v1176
      %v1681 = vpop.f32.mrf.mxu0
      %v1682 = vadd.f32 0.0, %v1681
      %v1683 = vpop.f32.mrf.mxu0
      %v1684 = vpop.f32.mrf.mxu0
      %v1685 = vadd.f32 0.0, %v1684
      %v1686 = vpop.f32.mrf.mxu0
      %1687 = vmatprep.mubr.bf16.mxu0 0
      %1688 = vmatmul.mubr.bf16.gmra.mxu0 %v1177
      %v1689 = vpop.f32.mrf.mxu0
      %v1690 = vadd.f32 0.0, %v1689
      %v1691 = vpop.f32.mrf.mxu0
      %v1692 = vpop.f32.mrf.mxu0
      %v1693 = vadd.f32 0.0, %v1692
      %v1694 = vpop.f32.mrf.mxu0
      %1695 = vmatprep.mubr.bf16.mxu0 0
      %1696 = vmatmul.mubr.bf16.gmra.mxu0 %v1178
      %v1697 = vpop.f32.mrf.mxu0
      %v1698 = vadd.f32 0.0, %v1697
      %v1699 = vpop.f32.mrf.mxu0
      %v1700 = vpop.f32.mrf.mxu0
      %v1701 = vadd.f32 0.0, %v1700
      %v1702 = vpop.f32.mrf.mxu0
      %1703 = vmatprep.mubr.bf16.mxu0 0
      %1704 = vmatmul.mubr.bf16.gmra.mxu0 %v1179
      %v1705 = vpop.f32.mrf.mxu0
      %v1706 = vadd.f32 0.0, %v1705
      %v1707 = vpop.f32.mrf.mxu0
      %v1708 = vpop.f32.mrf.mxu0
      %v1709 = vadd.f32 0.0, %v1708
      %v1710 = vpop.f32.mrf.mxu0
      %1711 = vdwg.mxu0
      %v1712 = vlaneseq
      %v1713 = vand.u32 %v1712, 127
      %v1714 = vadd.s32 %v1713, 128
      %vm1715 = vcmp.lt.s32.totalorder %v1713, 0
      %v1716 = vsub.s32 0, %v1713
      %v1717 = vsel %vm1715, %v1716, %v1713
      %v1718 = vshrl.u32 %v1717, 4
      %v1719 = vand.u32 %v1717, 15
      %v1720 = vsub.s32 0, %v1719
      %v1721 = vsel %vm1715, %v1720, %v1719
      %vm1722 = vcmp.lt.s32.totalorder %v1714, 0
      %v1723 = vsub.s32 0, %v1714
      %v1724 = vsel %vm1722, %v1723, %v1714
      %v1725 = vshrl.u32 %v1724, 4
      %v1726 = vand.u32 %v1724, 15
      %v1727 = vsub.s32 0, %v1726
      %v1728 = vsel %vm1722, %v1727, %v1726
      %vm1729 = vcmp.ne.s32.totalorder %v1721, 0
      %vm1730 = vcmp.ne.s32.totalorder %v1728, 0
      %vm1731 = vcmp.lt.s32.totalorder %v1721, 0
      %vm1732 = vcmp.lt.s32.totalorder %v1728, 0
      %vm1733 = vmand %vm1731, %vm1729
      %vm1734 = vmand %vm1732, %vm1730
      %v1735 = vadd.s32 %v1721, 16
      %v1736 = vadd.s32 %v1728, 16
      %v1737 = vsel %vm1733, %v1735, %v1721
      %v1738 = vsel %vm1734, %v1736, %v1728
      %vm1739 = vcmp.ge.s32.totalorder %v1737, 1
      %vm1740 = vcmp.ge.s32.totalorder %v1738, 1
      %vm1741 = vcmp.le.s32.totalorder %v1737, 14
      %vm1742 = vcmp.le.s32.totalorder %v1738, 14
      %1743 = vrot.lane.b32.xlu0 %v1361, 17
      %v1744 = vpop.permute.xlu0 %1743
      %1745 = vrot.lane.b32.xlu0 %v1365, 17
      %v1746 = vpop.permute.xlu0 %1745
      %1747 = vrot.lane.b32.xlu0 %v1371, 17
      %v1748 = vpop.permute.xlu0 %1747
      %1749 = vrot.lane.b32.xlu0 %v1375, 17
      %v1750 = vpop.permute.xlu0 %1749
      %1751 = vrot.lane.b32.xlu0 %v1363, 17
      %v1752 = vpop.permute.xlu0 %1751
      %1753 = vrot.lane.b32.xlu0 %v1367, 17
      %v1754 = vpop.permute.xlu0 %1753
      %1755 = vrot.lane.b32.xlu0 %v1373, 17
      %v1756 = vpop.permute.xlu0 %1755
      %1757 = vrot.lane.b32.xlu0 %v1377, 17
      %v1758 = vpop.permute.xlu0 %1757
      %1759 = vrot.lane.b32.xlu0 %v1574, 17
      %v1760 = vpop.permute.xlu0 %1759
      %1761 = vrot.lane.b32.xlu0 %v1577, 17
      %v1762 = vpop.permute.xlu0 %1761
      %1763 = vrot.lane.b32.xlu0 %v1582, 17
      %v1764 = vpop.permute.xlu0 %1763
      %1765 = vrot.lane.b32.xlu0 %v1585, 17
      %v1766 = vpop.permute.xlu0 %1765
      %vm1767 = vcmp.lt.s32.totalorder %v1713, 17
      %v1768 = vsel %vm1767, %v1744, %v1752
      %v1769 = vsel %vm1767, %v1746, %v1754
      %v1770 = vsel %vm1767, %v1748, %v1756
      %v1771 = vsel %vm1767, %v1750, %v1758
      %v1772 = vsel %vm1767, %v1760, %v1744
      %v1773 = vsel %vm1767, %v1762, %v1746
      %v1774 = vsel %vm1767, %v1764, %v1748
      %v1775 = vsel %vm1767, %v1766, %v1750
      %v1776 = vsel %vm1739, 1, 0
      %v1777 = vsel %vm1740, 1, 0
      %vm1778 = vcmp.eq.s32.totalorder %v1776, 1
      %vm1779 = vcmp.eq.s32.totalorder %v1777, 1
      %v1780 = vsel %vm1778, %v1772, 0.0
      %v1781 = vsel %vm1779, %v1768, 0.0
      %v1782 = vsel %vm1778, %v1773, 0.0
      %v1783 = vsel %vm1779, %v1769, 0.0
      %v1784 = vsel %vm1778, %v1774, 0.0
      %v1785 = vsel %vm1779, %v1770, 0.0
      %v1786 = vsel %vm1778, %v1775, 0.0
      %v1787 = vsel %vm1779, %v1771, 0.0
      %v1788 = vadd.f32 %v1780, 0.0
      %v1789 = vadd.f32 %v1781, 0.0
      %v1790 = vadd.f32 %v1782, 0.0
      %v1791 = vadd.f32 %v1783, 0.0
      %v1792 = vadd.f32 %v1784, 0.0
      %v1793 = vadd.f32 %v1785, 0.0
      %v1794 = vadd.f32 %v1786, 0.0
      %v1795 = vadd.f32 %v1787, 0.0
      %1796 = vrot.lane.b32.xlu0 %v1381, 16
      %v1797 = vpop.permute.xlu0 %1796
      %1798 = vrot.lane.b32.xlu0 %v1385, 16
      %v1799 = vpop.permute.xlu0 %1798
      %1800 = vrot.lane.b32.xlu0 %v1391, 16
      %v1801 = vpop.permute.xlu0 %1800
      %1802 = vrot.lane.b32.xlu0 %v1395, 16
      %v1803 = vpop.permute.xlu0 %1802
      %1804 = vrot.lane.b32.xlu0 %v1383, 16
      %v1805 = vpop.permute.xlu0 %1804
      %1806 = vrot.lane.b32.xlu0 %v1387, 16
      %v1807 = vpop.permute.xlu0 %1806
      %1808 = vrot.lane.b32.xlu0 %v1393, 16
      %v1809 = vpop.permute.xlu0 %1808
      %1810 = vrot.lane.b32.xlu0 %v1397, 16
      %v1811 = vpop.permute.xlu0 %1810
      %1812 = vrot.lane.b32.xlu0 %v1590, 16
      %v1813 = vpop.permute.xlu0 %1812
      %1814 = vrot.lane.b32.xlu0 %v1593, 16
      %v1815 = vpop.permute.xlu0 %1814
      %1816 = vrot.lane.b32.xlu0 %v1598, 16
      %v1817 = vpop.permute.xlu0 %1816
      %1818 = vrot.lane.b32.xlu0 %v1601, 16
      %v1819 = vpop.permute.xlu0 %1818
      %vm1820 = vcmp.lt.s32.totalorder %v1713, 16
      %v1821 = vsel %vm1820, %v1797, %v1805
      %v1822 = vsel %vm1820, %v1799, %v1807
      %v1823 = vsel %vm1820, %v1801, %v1809
      %v1824 = vsel %vm1820, %v1803, %v1811
      %v1825 = vsel %vm1820, %v1813, %v1797
      %v1826 = vsel %vm1820, %v1815, %v1799
      %v1827 = vsel %vm1820, %v1817, %v1801
      %v1828 = vsel %vm1820, %v1819, %v1803
      %v1829 = vadd.f32 %v1788, %v1825
      %v1830 = vadd.f32 %v1789, %v1821
      %v1831 = vadd.f32 %v1790, %v1826
      %v1832 = vadd.f32 %v1791, %v1822
      %v1833 = vadd.f32 %v1792, %v1827
      %v1834 = vadd.f32 %v1793, %v1823
      %v1835 = vadd.f32 %v1794, %v1828
      %v1836 = vadd.f32 %v1795, %v1824
      %1837 = vrot.lane.b32.xlu0 %v1401, 15
      %v1838 = vpop.permute.xlu0 %1837
      %1839 = vrot.lane.b32.xlu0 %v1405, 15
      %v1840 = vpop.permute.xlu0 %1839
      %1841 = vrot.lane.b32.xlu0 %v1411, 15
      %v1842 = vpop.permute.xlu0 %1841
      %1843 = vrot.lane.b32.xlu0 %v1415, 15
      %v1844 = vpop.permute.xlu0 %1843
      %1845 = vrot.lane.b32.xlu0 %v1403, 15
      %v1846 = vpop.permute.xlu0 %1845
      %1847 = vrot.lane.b32.xlu0 %v1407, 15
      %v1848 = vpop.permute.xlu0 %1847
      %1849 = vrot.lane.b32.xlu0 %v1413, 15
      %v1850 = vpop.permute.xlu0 %1849
      %1851 = vrot.lane.b32.xlu0 %v1417, 15
      %v1852 = vpop.permute.xlu0 %1851
      %1853 = vrot.lane.b32.xlu0 %v1606, 15
      %v1854 = vpop.permute.xlu0 %1853
      %1855 = vrot.lane.b32.xlu0 %v1609, 15
      %v1856 = vpop.permute.xlu0 %1855
      %1857 = vrot.lane.b32.xlu0 %v1614, 15
      %v1858 = vpop.permute.xlu0 %1857
      %1859 = vrot.lane.b32.xlu0 %v1617, 15
      %v1860 = vpop.permute.xlu0 %1859
      %vm1861 = vcmp.lt.s32.totalorder %v1713, 15
      %v1862 = vsel %vm1861, %v1838, %v1846
      %v1863 = vsel %vm1861, %v1840, %v1848
      %v1864 = vsel %vm1861, %v1842, %v1850
      %v1865 = vsel %vm1861, %v1844, %v1852
      %v1866 = vsel %vm1861, %v1854, %v1838
      %v1867 = vsel %vm1861, %v1856, %v1840
      %v1868 = vsel %vm1861, %v1858, %v1842
      %v1869 = vsel %vm1861, %v1860, %v1844
      %v1870 = vsel %vm1741, 1, 0
      %v1871 = vsel %vm1742, 1, 0
      %vm1872 = vcmp.eq.s32.totalorder %v1870, 1
      %vm1873 = vcmp.eq.s32.totalorder %v1871, 1
      %v1874 = vsel %vm1872, %v1866, 0.0
      %v1875 = vsel %vm1873, %v1862, 0.0
      %v1876 = vsel %vm1872, %v1867, 0.0
      %v1877 = vsel %vm1873, %v1863, 0.0
      %v1878 = vsel %vm1872, %v1868, 0.0
      %v1879 = vsel %vm1873, %v1864, 0.0
      %v1880 = vsel %vm1872, %v1869, 0.0
      %v1881 = vsel %vm1873, %v1865, 0.0
      %v1882 = vadd.f32 %v1829, %v1874
      %v1883 = vadd.f32 %v1830, %v1875
      %v1884 = vadd.f32 %v1831, %v1876
      %v1885 = vadd.f32 %v1832, %v1877
      %v1886 = vadd.f32 %v1833, %v1878
      %v1887 = vadd.f32 %v1834, %v1879
      %v1888 = vadd.f32 %v1835, %v1880
      %v1889 = vadd.f32 %v1836, %v1881
      %1890 = vrot.lane.b32.xlu0 %v1421, 1
      %v1891 = vpop.permute.xlu0 %1890
      %1892 = vrot.lane.b32.xlu0 %v1425, 1
      %v1893 = vpop.permute.xlu0 %1892
      %1894 = vrot.lane.b32.xlu0 %v1431, 1
      %v1895 = vpop.permute.xlu0 %1894
      %1896 = vrot.lane.b32.xlu0 %v1435, 1
      %v1897 = vpop.permute.xlu0 %1896
      %1898 = vrot.lane.b32.xlu0 %v1423, 1
      %v1899 = vpop.permute.xlu0 %1898
      %1900 = vrot.lane.b32.xlu0 %v1427, 1
      %v1901 = vpop.permute.xlu0 %1900
      %1902 = vrot.lane.b32.xlu0 %v1433, 1
      %v1903 = vpop.permute.xlu0 %1902
      %1904 = vrot.lane.b32.xlu0 %v1437, 1
      %v1905 = vpop.permute.xlu0 %1904
      %1906 = vrot.lane.b32.xlu0 %v1622, 1
      %v1907 = vpop.permute.xlu0 %1906
      %1908 = vrot.lane.b32.xlu0 %v1625, 1
      %v1909 = vpop.permute.xlu0 %1908
      %1910 = vrot.lane.b32.xlu0 %v1630, 1
      %v1911 = vpop.permute.xlu0 %1910
      %1912 = vrot.lane.b32.xlu0 %v1633, 1
      %v1913 = vpop.permute.xlu0 %1912
      %vm1914 = vcmp.lt.s32.totalorder %v1713, 1
      %v1915 = vsel %vm1914, %v1891, %v1899
      %v1916 = vsel %vm1914, %v1893, %v1901
      %v1917 = vsel %vm1914, %v1895, %v1903
      %v1918 = vsel %vm1914, %v1897, %v1905
      %v1919 = vsel %vm1914, %v1907, %v1891
      %v1920 = vsel %vm1914, %v1909, %v1893
      %v1921 = vsel %vm1914, %v1911, %v1895
      %v1922 = vsel %vm1914, %v1913, %v1897
      %v1923 = vsel %vm1778, %v1919, 0.0
      %v1924 = vsel %vm1779, %v1915, 0.0
      %v1925 = vsel %vm1778, %v1920, 0.0
      %v1926 = vsel %vm1779, %v1916, 0.0
      %v1927 = vsel %vm1778, %v1921, 0.0
      %v1928 = vsel %vm1779, %v1917, 0.0
      %v1929 = vsel %vm1778, %v1922, 0.0
      %v1930 = vsel %vm1779, %v1918, 0.0
      %v1931 = vadd.f32 %v1882, %v1923
      %v1932 = vadd.f32 %v1883, %v1924
      %v1933 = vadd.f32 %v1884, %v1925
      %v1934 = vadd.f32 %v1885, %v1926
      %v1935 = vadd.f32 %v1886, %v1927
      %v1936 = vadd.f32 %v1887, %v1928
      %v1937 = vadd.f32 %v1888, %v1929
      %v1938 = vadd.f32 %v1889, %v1930
      %v1939 = vadd.f32 %v1931, %v1441
      %v1940 = vadd.f32 %v1932, %v1443
      %v1941 = vadd.f32 %v1933, %v1445
      %v1942 = vadd.f32 %v1934, %v1447
      %v1943 = vadd.f32 %v1935, %v1451
      %v1944 = vadd.f32 %v1936, %v1453
      %v1945 = vadd.f32 %v1937, %v1455
      %v1946 = vadd.f32 %v1938, %v1457
      %1947 = vrot.lane.b32.xlu0 %v1461, 127
      %v1948 = vpop.permute.xlu0 %1947
      %1949 = vrot.lane.b32.xlu0 %v1465, 127
      %v1950 = vpop.permute.xlu0 %1949
      %1951 = vrot.lane.b32.xlu0 %v1471, 127
      %v1952 = vpop.permute.xlu0 %1951
      %1953 = vrot.lane.b32.xlu0 %v1475, 127
      %v1954 = vpop.permute.xlu0 %1953
      %1955 = vrot.lane.b32.xlu0 %v1463, 127
      %v1956 = vpop.permute.xlu0 %1955
      %1957 = vrot.lane.b32.xlu0 %v1467, 127
      %v1958 = vpop.permute.xlu0 %1957
      %1959 = vrot.lane.b32.xlu0 %v1473, 127
      %v1960 = vpop.permute.xlu0 %1959
      %1961 = vrot.lane.b32.xlu0 %v1477, 127
      %v1962 = vpop.permute.xlu0 %1961
      %1963 = vrot.lane.b32.xlu0 %v1650, 127
      %v1964 = vpop.permute.xlu0 %1963
      %1965 = vrot.lane.b32.xlu0 %v1653, 127
      %v1966 = vpop.permute.xlu0 %1965
      %1967 = vrot.lane.b32.xlu0 %v1658, 127
      %v1968 = vpop.permute.xlu0 %1967
      %1969 = vrot.lane.b32.xlu0 %v1661, 127
      %v1970 = vpop.permute.xlu0 %1969
      %vm1971 = vcmp.lt.s32.totalorder %v1713, 127
      %v1972 = vsel %vm1971, %v1956, %v1964
      %v1973 = vsel %vm1971, %v1958, %v1966
      %v1974 = vsel %vm1971, %v1960, %v1968
      %v1975 = vsel %vm1971, %v1962, %v1970
      %v1976 = vsel %vm1971, %v1948, %v1956
      %v1977 = vsel %vm1971, %v1950, %v1958
      %v1978 = vsel %vm1971, %v1952, %v1960
      %v1979 = vsel %vm1971, %v1954, %v1962
      %v1980 = vsel %vm1872, %v1976, 0.0
      %v1981 = vsel %vm1873, %v1972, 0.0
      %v1982 = vsel %vm1872, %v1977, 0.0
      %v1983 = vsel %vm1873, %v1973, 0.0
      %v1984 = vsel %vm1872, %v1978, 0.0
      %v1985 = vsel %vm1873, %v1974, 0.0
      %v1986 = vsel %vm1872, %v1979, 0.0
      %v1987 = vsel %vm1873, %v1975, 0.0
      %v1988 = vadd.f32 %v1939, %v1980
      %v1989 = vadd.f32 %v1940, %v1981
      %v1990 = vadd.f32 %v1941, %v1982
      %v1991 = vadd.f32 %v1942, %v1983
      %v1992 = vadd.f32 %v1943, %v1984
      %v1993 = vadd.f32 %v1944, %v1985
      %v1994 = vadd.f32 %v1945, %v1986
      %v1995 = vadd.f32 %v1946, %v1987
      %1996 = vrot.lane.b32.xlu0 %v1481, 113
      %v1997 = vpop.permute.xlu0 %1996
      %1998 = vrot.lane.b32.xlu0 %v1485, 113
      %v1999 = vpop.permute.xlu0 %1998
      %2000 = vrot.lane.b32.xlu0 %v1491, 113
      %v2001 = vpop.permute.xlu0 %2000
      %2002 = vrot.lane.b32.xlu0 %v1495, 113
      %v2003 = vpop.permute.xlu0 %2002
      %2004 = vrot.lane.b32.xlu0 %v1483, 113
      %v2005 = vpop.permute.xlu0 %2004
      %2006 = vrot.lane.b32.xlu0 %v1487, 113
      %v2007 = vpop.permute.xlu0 %2006
      %2008 = vrot.lane.b32.xlu0 %v1493, 113
      %v2009 = vpop.permute.xlu0 %2008
      %2010 = vrot.lane.b32.xlu0 %v1497, 113
      %v2011 = vpop.permute.xlu0 %2010
      %2012 = vrot.lane.b32.xlu0 %v1666, 113
      %v2013 = vpop.permute.xlu0 %2012
      %2014 = vrot.lane.b32.xlu0 %v1669, 113
      %v2015 = vpop.permute.xlu0 %2014
      %2016 = vrot.lane.b32.xlu0 %v1674, 113
      %v2017 = vpop.permute.xlu0 %2016
      %2018 = vrot.lane.b32.xlu0 %v1677, 113
      %v2019 = vpop.permute.xlu0 %2018
      %vm2020 = vcmp.lt.s32.totalorder %v1713, 113
      %v2021 = vsel %vm2020, %v2005, %v2013
      %v2022 = vsel %vm2020, %v2007, %v2015
      %v2023 = vsel %vm2020, %v2009, %v2017
      %v2024 = vsel %vm2020, %v2011, %v2019
      %v2025 = vsel %vm2020, %v1997, %v2005
      %v2026 = vsel %vm2020, %v1999, %v2007
      %v2027 = vsel %vm2020, %v2001, %v2009
      %v2028 = vsel %vm2020, %v2003, %v2011
      %v2029 = vsel %vm1778, %v2025, 0.0
      %v2030 = vsel %vm1779, %v2021, 0.0
      %v2031 = vsel %vm1778, %v2026, 0.0
      %v2032 = vsel %vm1779, %v2022, 0.0
      %v2033 = vsel %vm1778, %v2027, 0.0
      %v2034 = vsel %vm1779, %v2023, 0.0
      %v2035 = vsel %vm1778, %v2028, 0.0
      %v2036 = vsel %vm1779, %v2024, 0.0
      %v2037 = vadd.f32 %v1988, %v2029
      %v2038 = vadd.f32 %v1989, %v2030
      %v2039 = vadd.f32 %v1990, %v2031
      %v2040 = vadd.f32 %v1991, %v2032
      %v2041 = vadd.f32 %v1992, %v2033
      %v2042 = vadd.f32 %v1993, %v2034
      %v2043 = vadd.f32 %v1994, %v2035
      %v2044 = vadd.f32 %v1995, %v2036
      %2045 = vrot.lane.b32.xlu0 %v1501, 112
      %v2046 = vpop.permute.xlu0 %2045
      %2047 = vrot.lane.b32.xlu0 %v1505, 112
      %v2048 = vpop.permute.xlu0 %2047
      %2049 = vrot.lane.b32.xlu0 %v1511, 112
      %v2050 = vpop.permute.xlu0 %2049
      %2051 = vrot.lane.b32.xlu0 %v1515, 112
      %v2052 = vpop.permute.xlu0 %2051
      %2053 = vrot.lane.b32.xlu0 %v1503, 112
      %v2054 = vpop.permute.xlu0 %2053
      %2055 = vrot.lane.b32.xlu0 %v1507, 112
      %v2056 = vpop.permute.xlu0 %2055
      %2057 = vrot.lane.b32.xlu0 %v1513, 112
      %v2058 = vpop.permute.xlu0 %2057
      %2059 = vrot.lane.b32.xlu0 %v1517, 112
      %v2060 = vpop.permute.xlu0 %2059
      %2061 = vrot.lane.b32.xlu0 %v1682, 112
      %v2062 = vpop.permute.xlu0 %2061
      %2063 = vrot.lane.b32.xlu0 %v1685, 112
      %v2064 = vpop.permute.xlu0 %2063
      %2065 = vrot.lane.b32.xlu0 %v1690, 112
      %v2066 = vpop.permute.xlu0 %2065
      %2067 = vrot.lane.b32.xlu0 %v1693, 112
      %v2068 = vpop.permute.xlu0 %2067
      %vm2069 = vcmp.lt.s32.totalorder %v1713, 112
      %v2070 = vsel %vm2069, %v2054, %v2062
      %v2071 = vsel %vm2069, %v2056, %v2064
      %v2072 = vsel %vm2069, %v2058, %v2066
      %v2073 = vsel %vm2069, %v2060, %v2068
      %v2074 = vsel %vm2069, %v2046, %v2054
      %v2075 = vsel %vm2069, %v2048, %v2056
      %v2076 = vsel %vm2069, %v2050, %v2058
      %v2077 = vsel %vm2069, %v2052, %v2060
      %v2078 = vadd.f32 %v2037, %v2074
      %v2079 = vadd.f32 %v2038, %v2070
      %v2080 = vadd.f32 %v2039, %v2075
      %v2081 = vadd.f32 %v2040, %v2071
      %v2082 = vadd.f32 %v2041, %v2076
      %v2083 = vadd.f32 %v2042, %v2072
      %v2084 = vadd.f32 %v2043, %v2077
      %v2085 = vadd.f32 %v2044, %v2073
      %2086 = vrot.lane.b32.xlu0 %v1521, 111
      %v2087 = vpop.permute.xlu0 %2086
      %2088 = vrot.lane.b32.xlu0 %v1525, 111
      %v2089 = vpop.permute.xlu0 %2088
      %2090 = vrot.lane.b32.xlu0 %v1531, 111
      %v2091 = vpop.permute.xlu0 %2090
      %2092 = vrot.lane.b32.xlu0 %v1535, 111
      %v2093 = vpop.permute.xlu0 %2092
      %2094 = vrot.lane.b32.xlu0 %v1523, 111
      %v2095 = vpop.permute.xlu0 %2094
      %2096 = vrot.lane.b32.xlu0 %v1527, 111
      %v2097 = vpop.permute.xlu0 %2096
      %2098 = vrot.lane.b32.xlu0 %v1533, 111
      %v2099 = vpop.permute.xlu0 %2098
      %2100 = vrot.lane.b32.xlu0 %v1537, 111
      %v2101 = vpop.permute.xlu0 %2100
      %2102 = vrot.lane.b32.xlu0 %v1698, 111
      %v2103 = vpop.permute.xlu0 %2102
      %2104 = vrot.lane.b32.xlu0 %v1701, 111
      %v2105 = vpop.permute.xlu0 %2104
      %2106 = vrot.lane.b32.xlu0 %v1706, 111
      %v2107 = vpop.permute.xlu0 %2106
      %2108 = vrot.lane.b32.xlu0 %v1709, 111
      %v2109 = vpop.permute.xlu0 %2108
      %vm2110 = vcmp.lt.s32.totalorder %v1713, 111
      %v2111 = vsel %vm2110, %v2095, %v2103
      %v2112 = vsel %vm2110, %v2097, %v2105
      %v2113 = vsel %vm2110, %v2099, %v2107
      %v2114 = vsel %vm2110, %v2101, %v2109
      %v2115 = vsel %vm2110, %v2087, %v2095
      %v2116 = vsel %vm2110, %v2089, %v2097
      %v2117 = vsel %vm2110, %v2091, %v2099
      %v2118 = vsel %vm2110, %v2093, %v2101
      %v2119 = vsel %vm1872, %v2115, 0.0
      %v2120 = vsel %vm1873, %v2111, 0.0
      %v2121 = vsel %vm1872, %v2116, 0.0
      %v2122 = vsel %vm1873, %v2112, 0.0
      %v2123 = vsel %vm1872, %v2117, 0.0
      %v2124 = vsel %vm1873, %v2113, 0.0
      %v2125 = vsel %vm1872, %v2118, 0.0
      %v2126 = vsel %vm1873, %v2114, 0.0
      %v2127 = vadd.f32 %v2078, %v2119
      %v2128 = vadd.f32 %v2079, %v2120
      %v2129 = vadd.f32 %v2080, %v2121
      %v2130 = vadd.f32 %v2081, %v2122
      %v2131 = vadd.f32 %v2082, %v2123
      %v2132 = vadd.f32 %v2083, %v2124
      %v2133 = vadd.f32 %v2084, %v2125
      %v2134 = vadd.f32 %v2085, %v2126
      %2135 = vst [vmem:[%s251] sm:$0xff] %v2127
      %2136 = vst [vmem:[%s251 + $0x8] sm:$0xff] %v2128
      %2137 = vst [vmem:[%s251 + $0x10] sm:$0xff] %v2129
      %2138 = vst [vmem:[%s251 + $0x18] sm:$0xff] %v2130
      %2139 = vst [vmem:[%s251 + $0x20] sm:$0xff] %v2131
      %2140 = vst [vmem:[%s251 + $0x28] sm:$0xff] %v2132
      %2141 = vst [vmem:[%s251 + $0x30] sm:$0xff] %v2133
      %2142 = vst [vmem:[%s251 + $0x38] sm:$0xff] %v2134
      %p2143 = scmp.lt.s32.totalorder %s17, 1
      %s2144 = scalar_select %p2143, %s17, 1
      %s2145 = smul.addr %s2144, 8
      %s2146 = smul.addr %s2145, 8
      %s2147 = scalar_lea.vmem %s6, %s2146
      // Predicated region
      $region45: #{_lambda_.1} parent=43 // pred_check
        %p2148 = pneg %p166
      $region46: #{_lambda_.1} parent=43 // pred_check_branch
        %2150 = sbr.rel (%p2148) target = $region48
      $region47: #{_lambda_.1} parent=43 // pred_region
        _
      $region48: #{_lambda_.1} parent=43 // pred_fallthru
        _
    $region44: #{_lambda_.1} parent=5 // pred_fallthru
      _
    %p2151 = scmp.le.s32.totalorder 2, %s12
    // Predicated region
    $region49: #{_lambda_.1} parent=5 // pred_check
      %p2152 = pneg %p2151
    $region50: #{_lambda_.1} parent=5 // pred_check_branch
      %2154 = sbr.rel (%p2152) target = $region52
    $region51: #{_lambda_.1} parent=5 // pred_region
      %s2155 = ssub.s32 %s12, 2
      // Predicated region
      $region53: #{_lambda_.1} parent=51 // pred_check
        %p2156 = pneg %p172
      $region54: #{_lambda_.1} parent=51 // pred_check_branch
        %2158 = sbr.rel (%p2156) target = $region56
      $region55: #{_lambda_.1} parent=51 // pred_region
        %p2159 = scmp.lt.s32.totalorder %s18, 1
        %s2160 = scalar_select %p2159, %s18, 1
        %s2161 = smul.addr %s2160, 8
        %s2162 = smul.addr %s2161, 8
        %s2163 = scalar_lea.vmem %s6, %s2162
      $region56: #{_lambda_.1} parent=51 // pred_fallthru
        _
    $region52: #{_lambda_.1} parent=5 // pred_fallthru
      _
  $region6: #{_lambda_.1} parent=0 // loop_footer
    %s16 = sadd.s32 1, %s12
  $region7: #{_lambda_.1} parent=0 // loop_footer_branch
    %11 = sbr.rel target = $region3
  $region8: #{_lambda_.1} parent=0 // loop_exit
    _

</llo_original>
